<compile_context>
chip_gen: v6e
topology: v6e:2x2x1
jax: 0.10.0
libtpu: 0.0.40
codegen_flags: <defaults>
</compile_context>

<pallas_src>
import numpy as np
import jax
import jax.numpy as jnp
from jax.experimental import pallas as pl
from jax.experimental.pallas import tpu as pltpu


# ----------------------------------------------------------------------------
# Parameter setup (glue): PIL-style separable bicubic resampling matrix.
# ----------------------------------------------------------------------------
def _pil_bicubic_matrix(out_size: int, in_size: int) -> np.ndarray:
    """Dense (out_size, in_size) resampling matrix matching PIL's bicubic
    (a = -0.5, antialiased when downscaling)."""
    a = -0.5

    def bicubic(x):
        x = abs(x)
        if x < 1.0:
            return ((a + 2.0) * x - (a + 3.0)) * x * x + 1.0
        if x < 2.0:
            return (((x - 5.0) * x + 8.0) * x - 4.0) * a
        return 0.0

    support = 2.0
    scale = in_size / out_size
    filterscale = max(scale, 1.0)
    supp = support * filterscale
    ss = 1.0 / filterscale

    M = np.zeros((out_size, in_size), dtype=np.float64)
    for xx in range(out_size):
        center = (xx + 0.5) * scale
        xmin = int(max(center - supp + 0.5, 0))
        xmax = int(min(center + supp + 0.5, in_size))
        w = np.array([bicubic((x - center + 0.5) * ss) for x in range(xmin, xmax)],
                     dtype=np.float64)
        w /= w.sum()
        M[xx, xmin:xmax] = w
    return M.astype(np.float32)


# ----------------------------------------------------------------------------
# Pallas kernel: uint8 in -> two bf16 MXU matmuls (pad folded in) -> uint8 out.
# ----------------------------------------------------------------------------
def _resize_pad_kernel(img_ref, bw_ref, ah_ref, out_ref):
    # img_ref: (H, W*C)        uint8  source image, channels interleaved in lanes
    # bw_ref : (W*C, size*C)   bf16   horizontal resample (+ left/right zero pad)
    # ah_ref : (size, H)       bf16   vertical resample   (+ top/bottom zero pad)
    # out_ref: (size, size*C)  uint8  padded result
    x = img_ref[...].astype(jnp.int32).astype(jnp.float32).astype(jnp.bfloat16)

    # Horizontal pass (PIL resamples horizontally first), all channels at once.
    h = jnp.dot(x, bw_ref[...], preferred_element_type=jnp.float32)   # (H, size*C) f32
    # PIL stores the intermediate as uint8: round-half-up + clamp per pass.
    h = jnp.clip(jnp.floor(h + 0.5), 0.0, 255.0)

    # Vertical pass.
    v = jnp.dot(ah_ref[...], h.astype(jnp.bfloat16),
                preferred_element_type=jnp.float32)                   # (size, size*C) f32
    v = jnp.clip(jnp.floor(v + 0.5), 0.0, 255.0)

    # Full, lane-dense, unmasked uint8 store.
    out_ref[...] = v.astype(jnp.int32).astype(jnp.uint8)


def single_cell_resize_keep_aspect_ratio(img: jax.Array, size: int = 224) -> jax.Array:
    """img: (H, W, 4) uint8  ->  (min(size,224), min(size,224), 4) uint8."""
    H, W, C = img.shape

    # ---- shape / padding logic (static, mirrors the PyTorch forward) ----
    ratio = H / W
    if ratio > 1:
        new_w = min(int(size / ratio), size)   # new_x_shape (width)
        new_h = int(size)                      # new_y_shape (height)
    else:
        new_w = int(size)
        new_h = min(int(size * ratio), size)

    upper_pad = int(max((size - new_h) / 2, 0))
    lower_pad = int(max((size - new_h) / 2, 0))
    left_pad = int(max((size - new_w) / 2, 0))
    right_pad = int(max((size - new_w) / 2, 0))
    upper_pad += size - (upper_pad + lower_pad + new_h)
    left_pad += size - (left_pad + right_pad + new_w)

    # ---- resampling matrices with the zero padding folded in as zero rows /
    #      columns (extra MXU FLOPs on zeros are free, store stays unmasked) ----
    a_h = np.zeros((size, H), dtype=np.float32)
    a_h[upper_pad:upper_pad + new_h, :] = _pil_bicubic_matrix(new_h, H)
    a_w = np.zeros((size, W), dtype=np.float32)
    a_w[left_pad:left_pad + new_w, :] = _pil_bicubic_matrix(new_w, W)
    # Horizontal pass acts on (H, W*C) with channels interleaved in lanes:
    #   B[w*C + c, w_out*C + c] = a_w[w_out, w]   ==   kron(a_w^T, I_C)
    b_w = np.kron(a_w.T, np.eye(C, dtype=np.float32))          # (W*C, size*C)

    ah = jnp.asarray(a_h, dtype=jnp.bfloat16)                   # (size, H)
    bw = jnp.asarray(b_w, dtype=jnp.bfloat16)                   # (W*C, size*C)

    # Free metadata reshape: collapse contiguous trailing dims, stays uint8.
    img2d = img.reshape(H, W * C)

    flops = 2 * H * (W * C) * (size * C) + 2 * size * H * (size * C)
    bytes_accessed = (H * W * C            # uint8 image in
                      + ah.size * 2        # bf16 vertical matrix
                      + bw.size * 2        # bf16 horizontal matrix
                      + size * size * C)   # uint8 output

    out2d = pl.pallas_call(
        _resize_pad_kernel,
        out_shape=jax.ShapeDtypeStruct((size, size * C), jnp.uint8),
        in_specs=[
            pl.BlockSpec(memory_space=pltpu.MemorySpace.VMEM),  # img (H, W*C) u8
            pl.BlockSpec(memory_space=pltpu.MemorySpace.VMEM),  # bw  bf16
            pl.BlockSpec(memory_space=pltpu.MemorySpace.VMEM),  # ah  bf16
        ],
        out_specs=pl.BlockSpec(memory_space=pltpu.MemorySpace.VMEM),
        cost_estimate=pl.CostEstimate(
            flops=int(flops), transcendentals=0, bytes_accessed=int(bytes_accessed)),
    )(img2d, bw, ah)

    # Free reshape to HWC, then the module's hard-coded [:224, :224, :] crop.
    out = out2d.reshape(size, size, C)
    return out[:224, :224, :]


if __name__ == "__main__":
    key = jax.random.PRNGKey(0)
    # Small deterministic RGBA test image, taller than wide (ratio > 1 branch).
    H, W, C = 32, 24, 4
    img = jax.random.randint(key, (H, W, C), 0, 256, dtype=jnp.int32).astype(jnp.uint8)

    out = single_cell_resize_keep_aspect_ratio(img, size=224)
    out = jax.block_until_ready(out)

    assert out.shape == (224, 224, 4), out.shape
    assert out.dtype == jnp.uint8, out.dtype
    print("KERNEL_OK")
</pallas_src>

<mosaic_0001>
module attributes {stable_mosaic.version = 11 : i64} {
  func.func @_resize_pad_kernel(%arg0: memref<32x96xi8, #tpu.memory_space<vmem>>, %arg1: memref<96x896xbf16, #tpu.memory_space<vmem>>, %arg2: memref<224x32xbf16, #tpu.memory_space<vmem>>, %arg3: memref<224x896xi8, #tpu.memory_space<vmem>>) attributes {dimension_semantics = [], scalar_prefetch = 0 : i64, scratch_operands = 0 : i64, tpu.core_type = #tpu.core_type<tc>} {
    %c0 = arith.constant 0 : index
    %c0_0 = arith.constant 0 : index
    %0 = vector.load %arg0[%c0, %c0_0] : memref<32x96xi8, #tpu.memory_space<vmem>>, vector<32x96xi8>
    %1 = arith.extui %0 : vector<32x96xi8> to vector<32x96xi32>
    %2 = arith.sitofp %1 : vector<32x96xi32> to vector<32x96xf32>
    %3 = arith.truncf %2 : vector<32x96xf32> to vector<32x96xbf16>
    %c0_1 = arith.constant 0 : index
    %c0_2 = arith.constant 0 : index
    %4 = vector.load %arg1[%c0_1, %c0_2] : memref<96x896xbf16, #tpu.memory_space<vmem>>, vector<96x896xbf16>
    %cst = arith.constant dense<0.000000e+00> : vector<32x896xf32>
    %5 = tpu.matmul %3, %4, %cst {dimension_numbers = #tpu.dot_dimension_numbers<[1], [0], [0], [1], [0, 0, 1, 1], [], []>} : vector<32x96xbf16>, vector<96x896xbf16>, vector<32x896xf32> -> vector<32x896xf32>
    %cst_3 = arith.constant 5.000000e-01 : f32
    %6 = vector.broadcast %cst_3 : f32 to vector<32x896xf32>
    %7 = arith.addf %5, %6 : vector<32x896xf32>
    %8 = math.floor %7 : vector<32x896xf32>
    %cst_4 = arith.constant 0.000000e+00 : f32
    %cst_5 = arith.constant 2.550000e+02 : f32
    %9 = vector.broadcast %cst_4 : f32 to vector<32x896xf32>
    %10 = arith.maximumf %9, %8 : vector<32x896xf32>
    %11 = vector.broadcast %cst_5 : f32 to vector<32x896xf32>
    %12 = arith.minimumf %11, %10 : vector<32x896xf32>
    %c0_6 = arith.constant 0 : index
    %c0_7 = arith.constant 0 : index
    %13 = vector.load %arg2[%c0_6, %c0_7] : memref<224x32xbf16, #tpu.memory_space<vmem>>, vector<224x32xbf16>
    %14 = arith.truncf %12 : vector<32x896xf32> to vector<32x896xbf16>
    %cst_8 = arith.constant dense<0.000000e+00> : vector<224x896xf32>
    %15 = tpu.matmul %13, %14, %cst_8 {dimension_numbers = #tpu.dot_dimension_numbers<[1], [0], [0], [1], [0, 0, 1, 1], [], []>} : vector<224x32xbf16>, vector<32x896xbf16>, vector<224x896xf32> -> vector<224x896xf32>
    %cst_9 = arith.constant 5.000000e-01 : f32
    %16 = vector.broadcast %cst_9 : f32 to vector<224x896xf32>
    %17 = arith.addf %15, %16 : vector<224x896xf32>
    %18 = math.floor %17 : vector<224x896xf32>
    %cst_10 = arith.constant 0.000000e+00 : f32
    %cst_11 = arith.constant 2.550000e+02 : f32
    %19 = vector.broadcast %cst_10 : f32 to vector<224x896xf32>
    %20 = arith.maximumf %19, %18 : vector<224x896xf32>
    %21 = vector.broadcast %cst_11 : f32 to vector<224x896xf32>
    %22 = arith.minimumf %21, %20 : vector<224x896xf32>
    %23 = arith.fptosi %22 : vector<224x896xf32> to vector<224x896xi32>
    %24 = arith.trunci %23 : vector<224x896xi32> to vector<224x896xi8>
    %c0_12 = arith.constant 0 : index
    %c0_13 = arith.constant 0 : index
    %25 = vector.load %arg3[%c0_12, %c0_13] : memref<224x896xi8, #tpu.memory_space<vmem>>, vector<224x896xi8>
    tpu.vector_store %arg3[%c0_12, %c0_13], %24 {strides = array<i32>} : memref<224x896xi8, #tpu.memory_space<vmem>>, vector<224x896xi8>,
    return
  }
}

</mosaic_0001>

<llo_original>
// kernel: tpu_custom_call.1
$region0: #{tpu_custom_call.1}
  #allocation0 [shape = 'u32[]', space=smem, size = 0x4, offset = 0x4, fixed_abs, tag = 'smem constant byte address 0x4 - core index']
  #allocation1 [shape = 'u32[144,128]{1,0:T(1,128)}', space=vmem, size = 0x12000, scoped, tag = 'internal scratch']
  %s0 = inlined_call_operand.vmem [shape: u8[32,96], index: 0, kind: input, shape index: {}]
  %s1 = inlined_call_operand.hbm [shape: bf16[96,896], index: 1, kind: input, shape index: {}]
  %s2 = inlined_call_operand.vmem [shape: bf16[224,32], index: 2, kind: input, shape index: {}]
  %s3 = inlined_call_operand.hbm [shape: u8[224,896], index: 3, kind: output, shape index: {}]
  %s4 = sld [smem:[#allocation0]]
  $region26: #{tpu_custom_call.1} parent=0
    _
  %s6 = ssub.s32 1, %s4
  %s7 = scalar_select 0, %s6, %s4
  $region1: #{tpu_custom_call.1} parent=0
    #allocation2 [shape = 'u8[172032]{0}', space=vmem, size = 0x2a000, scoped, tag = 'input window, operand 1, single buffered']
    #allocation3 [shape = 's32[1]{0}', space=sflag, size = 0x4, scoped, tag = 'scoped memory for tpu_custom_call.1']
    #allocation4 [shape = 's32[1]{0}', space=sflag, size = 0x4, scoped, tag = 'scoped memory for tpu_custom_call.1']
    #allocation5 [shape = 'u8[200704]{0}', space=vmem, size = 0x31000, scoped, tag = 'output window, operand 0, single buffered']
    %8 = vsyncpa [#allocation3], 0
    %9 = vsyncpa [#allocation4], 0
    // Predicated region
    $region2: #{tpu_custom_call.1} parent=1 // pred_check
      _
    $region3: #{tpu_custom_call.1} parent=1 // pred_check_branch
      %11 = sbr.rel (0) target = $region5
    $region4: #{tpu_custom_call.1} parent=1 // pred_region
      _
    $region5: #{tpu_custom_call.1} parent=1 // pred_fallthru
      _
    // Predicated region
    $region6: #{tpu_custom_call.1} parent=1 // pred_check
      _
    $region7: #{tpu_custom_call.1} parent=1 // pred_check_branch
      %13 = sbr.rel (0) target = $region9
    $region8: #{tpu_custom_call.1} parent=1 // pred_region
      %s15 = ssub.s32 5376, 5376
      %16 = vsyncadd [#allocation3], %s15
      %s17 = sshll.u32 [#allocation2], 4
      %s18 = int_to_ptr.vmem [resolvable:$true] %s17
      %23 = dma.hbm_to_vmem [thread:$0]  %s1, 5376, %s18, [#allocation3], 448, 448, 28
    $region9: #{tpu_custom_call.1} parent=1 // pred_fallthru
      _
    // Predicated region
    $region10: #{tpu_custom_call.1} parent=1 // pred_check
      _
    $region11: #{tpu_custom_call.1} parent=1 // pred_check_branch
      %25 = sbr.rel (0) target = $region13
    $region12: #{tpu_custom_call.1} parent=1 // pred_region
      _
    $region13: #{tpu_custom_call.1} parent=1 // pred_fallthru
      _
    // Predicated region
    $region14: #{tpu_custom_call.1} parent=1 // pred_check
      _
    $region15: #{tpu_custom_call.1} parent=1 // pred_check_branch
      %27 = sbr.rel (0) target = $region17
    $region16: #{tpu_custom_call.1} parent=1 // pred_region
      %28 = dma.done [#allocation3], 5376
    $region17: #{tpu_custom_call.1} parent=1 // pred_fallthru
      _
    %v30 = vld [vmem:[%s0] sm:$0xff]
    %v31 = vunpack.c.l.u8.bf16 %v30
    %v32 = vunpack.c.h.u8.bf16 %v30
    %v33 = vld [vmem:[#allocation2] sm:$0xff]
    %v34 = vld [vmem:[#allocation2 + $0x8] sm:$0xff]
    %v35 = vld [vmem:[#allocation2 + $0x10] sm:$0xff]
    %v36 = vld [vmem:[#allocation2 + $0x18] sm:$0xf]
    %v37 = vld [vmem:[#allocation2 + $0x1c] sm:$0xff]
    %v38 = vld [vmem:[#allocation2 + $0x24] sm:$0xff]
    %v39 = vld [vmem:[#allocation2 + $0x2c] sm:$0xff]
    %v40 = vld [vmem:[#allocation2 + $0x34] sm:$0xf]
    %v41 = vld [vmem:[#allocation2 + $0x38] sm:$0xff]
    %v42 = vld [vmem:[#allocation2 + $0x40] sm:$0xff]
    %v43 = vld [vmem:[#allocation2 + $0x48] sm:$0xff]
    %v44 = vld [vmem:[#allocation2 + $0x50] sm:$0xf]
    %v45 = vld [vmem:[#allocation2 + $0x54] sm:$0xff]
    %v46 = vld [vmem:[#allocation2 + $0x5c] sm:$0xff]
    %v47 = vld [vmem:[#allocation2 + $0x64] sm:$0xff]
    %v48 = vld [vmem:[#allocation2 + $0x6c] sm:$0xf]
    %v49 = vld [vmem:[#allocation2 + $0x70] sm:$0xff]
    %v50 = vld [vmem:[#allocation2 + $0x78] sm:$0xff]
    %v51 = vld [vmem:[#allocation2 + $0x80] sm:$0xff]
    %v52 = vld [vmem:[#allocation2 + $0x88] sm:$0xf]
    %v53 = vld [vmem:[#allocation2 + $0x8c] sm:$0xff]
    %v54 = vld [vmem:[#allocation2 + $0x94] sm:$0xff]
    %v55 = vld [vmem:[#allocation2 + $0x9c] sm:$0xff]
    %v56 = vld [vmem:[#allocation2 + $0xa4] sm:$0xf]
    %v57 = vld [vmem:[#allocation2 + $0xa8] sm:$0xff]
    %v58 = vld [vmem:[#allocation2 + $0xb0] sm:$0xff]
    %v59 = vld [vmem:[#allocation2 + $0xb8] sm:$0xff]
    %v60 = vld [vmem:[#allocation2 + $0xc0] sm:$0xf]
    %v61 = vld [vmem:[#allocation2 + $0xc4] sm:$0xff]
    %v62 = vld [vmem:[#allocation2 + $0xcc] sm:$0xff]
    %v63 = vld [vmem:[#allocation2 + $0xd4] sm:$0xff]
    %v64 = vld [vmem:[#allocation2 + $0xdc] sm:$0xf]
    %v65 = vld [vmem:[#allocation2 + $0xe0] sm:$0xff]
    %v66 = vld [vmem:[#allocation2 + $0xe8] sm:$0xff]
    %v67 = vld [vmem:[#allocation2 + $0xf0] sm:$0xff]
    %v68 = vld [vmem:[#allocation2 + $0xf8] sm:$0xf]
    %v69 = vld [vmem:[#allocation2 + $0xfc] sm:$0xff]
    %v70 = vld [vmem:[#allocation2 + $0x104] sm:$0xff]
    %v71 = vld [vmem:[#allocation2 + $0x10c] sm:$0xff]
    %v72 = vld [vmem:[#allocation2 + $0x114] sm:$0xf]
    %v73 = vld [vmem:[#allocation2 + $0x118] sm:$0xff]
    %v74 = vld [vmem:[#allocation2 + $0x120] sm:$0xff]
    %v75 = vld [vmem:[#allocation2 + $0x128] sm:$0xff]
    %v76 = vld [vmem:[#allocation2 + $0x130] sm:$0xf]
    %v77 = vld [vmem:[#allocation2 + $0x134] sm:$0xff]
    %v78 = vld [vmem:[#allocation2 + $0x13c] sm:$0xff]
    %v79 = vld [vmem:[#allocation2 + $0x144] sm:$0xff]
    %v80 = vld [vmem:[#allocation2 + $0x14c] sm:$0xf]
    %v129 = vunpack.c.l.b16 %v33
    %v130 = vunpack.c.h.b16 %v33
    %v131 = vunpack.c.l.b16 %v34
    %v132 = vunpack.c.h.b16 %v34
    %v133 = vunpack.c.l.b16 %v35
    %v134 = vunpack.c.h.b16 %v35
    %v135 = vunpack.c.l.b16 %v36
    %v136 = vunpack.c.l.b16 %v37
    %v137 = vunpack.c.h.b16 %v37
    %v138 = vunpack.c.l.b16 %v38
    %v139 = vunpack.c.h.b16 %v38
    %v140 = vunpack.c.l.b16 %v39
    %v141 = vunpack.c.h.b16 %v39
    %v142 = vunpack.c.l.b16 %v40
    %v143 = vunpack.c.l.b16 %v41
    %v144 = vunpack.c.h.b16 %v41
    %v145 = vunpack.c.l.b16 %v42
    %v146 = vunpack.c.h.b16 %v42
    %v147 = vunpack.c.l.b16 %v43
    %v148 = vunpack.c.h.b16 %v43
    %v149 = vunpack.c.l.b16 %v44
    %v150 = vunpack.c.l.b16 %v45
    %v151 = vunpack.c.h.b16 %v45
    %v152 = vunpack.c.l.b16 %v46
    %v153 = vunpack.c.h.b16 %v46
    %v154 = vunpack.c.l.b16 %v47
    %v155 = vunpack.c.h.b16 %v47
    %v156 = vunpack.c.l.b16 %v48
    %v157 = vunpack.c.l.b16 %v49
    %v158 = vunpack.c.h.b16 %v49
    %v159 = vunpack.c.l.b16 %v50
    %v160 = vunpack.c.h.b16 %v50
    %v161 = vunpack.c.l.b16 %v51
    %v162 = vunpack.c.h.b16 %v51
    %v163 = vunpack.c.l.b16 %v52
    %v164 = vunpack.c.l.b16 %v53
    %v165 = vunpack.c.h.b16 %v53
    %v166 = vunpack.c.l.b16 %v54
    %v167 = vunpack.c.h.b16 %v54
    %v168 = vunpack.c.l.b16 %v55
    %v169 = vunpack.c.h.b16 %v55
    %v170 = vunpack.c.l.b16 %v56
    %v171 = vunpack.c.l.b16 %v57
    %v172 = vunpack.c.h.b16 %v57
    %v173 = vunpack.c.l.b16 %v58
    %v174 = vunpack.c.h.b16 %v58
    %v175 = vunpack.c.l.b16 %v59
    %v176 = vunpack.c.h.b16 %v59
    %v177 = vunpack.c.l.b16 %v60
    %v178 = vunpack.c.l.b16 %v61
    %v179 = vunpack.c.h.b16 %v61
    %v180 = vunpack.c.l.b16 %v62
    %v181 = vunpack.c.h.b16 %v62
    %v182 = vunpack.c.l.b16 %v63
    %v183 = vunpack.c.h.b16 %v63
    %v184 = vunpack.c.l.b16 %v64
    %v185 = vunpack.c.l.b16 %v65
    %v186 = vunpack.c.h.b16 %v65
    %v187 = vunpack.c.l.b16 %v66
    %v188 = vunpack.c.h.b16 %v66
    %v189 = vunpack.c.l.b16 %v67
    %v190 = vunpack.c.h.b16 %v67
    %v191 = vunpack.c.l.b16 %v68
    %v192 = vunpack.c.l.b16 %v69
    %v193 = vunpack.c.h.b16 %v69
    %v194 = vunpack.c.l.b16 %v70
    %v195 = vunpack.c.h.b16 %v70
    %v196 = vunpack.c.l.b16 %v71
    %v197 = vunpack.c.h.b16 %v71
    %v198 = vunpack.c.l.b16 %v72
    %v199 = vunpack.c.l.b16 %v73
    %v200 = vunpack.c.h.b16 %v73
    %v201 = vunpack.c.l.b16 %v74
    %v202 = vunpack.c.h.b16 %v74
    %v203 = vunpack.c.l.b16 %v75
    %v204 = vunpack.c.h.b16 %v75
    %v205 = vunpack.c.l.b16 %v76
    %v206 = vunpack.c.l.b16 %v77
    %v207 = vunpack.c.h.b16 %v77
    %v208 = vunpack.c.l.b16 %v78
    %v209 = vunpack.c.h.b16 %v78
    %v210 = vunpack.c.l.b16 %v79
    %v211 = vunpack.c.h.b16 %v79
    %v212 = vunpack.c.l.b16 %v80
    %v213 = vpack.c.b16 %v136, %v129
    %v214 = vpack.c.b16 %v137, %v130
    %v215 = vpack.c.b16 %v138, %v131
    %v216 = vpack.c.b16 %v139, %v132
    %v217 = vpack.c.b16 %v140, %v133
    %v218 = vpack.c.b16 %v141, %v134
    %v219 = vpack.c.b16 %v142, %v135
    %v220 = vpack.c.b16 %v150, %v143
    %v221 = vpack.c.b16 %v151, %v144
    %v222 = vpack.c.b16 %v152, %v145
    %v223 = vpack.c.b16 %v153, %v146
    %v224 = vpack.c.b16 %v154, %v147
    %v225 = vpack.c.b16 %v155, %v148
    %v226 = vpack.c.b16 %v156, %v149
    %v227 = vpack.c.b16 %v164, %v157
    %v228 = vpack.c.b16 %v165, %v158
    %v229 = vpack.c.b16 %v166, %v159
    %v230 = vpack.c.b16 %v167, %v160
    %v231 = vpack.c.b16 %v168, %v161
    %v232 = vpack.c.b16 %v169, %v162
    %v233 = vpack.c.b16 %v170, %v163
    %v234 = vpack.c.b16 %v178, %v171
    %v235 = vpack.c.b16 %v179, %v172
    %v236 = vpack.c.b16 %v180, %v173
    %v237 = vpack.c.b16 %v181, %v174
    %v238 = vpack.c.b16 %v182, %v175
    %v239 = vpack.c.b16 %v183, %v176
    %v240 = vpack.c.b16 %v184, %v177
    %v241 = vpack.c.b16 %v192, %v185
    %v242 = vpack.c.b16 %v193, %v186
    %v243 = vpack.c.b16 %v194, %v187
    %v244 = vpack.c.b16 %v195, %v188
    %v245 = vpack.c.b16 %v196, %v189
    %v246 = vpack.c.b16 %v197, %v190
    %v247 = vpack.c.b16 %v198, %v191
    %v248 = vpack.c.b16 %v206, %v199
    %v249 = vpack.c.b16 %v207, %v200
    %v250 = vpack.c.b16 %v208, %v201
    %v251 = vpack.c.b16 %v209, %v202
    %v252 = vpack.c.b16 %v210, %v203
    %v253 = vpack.c.b16 %v211, %v204
    %v254 = vpack.c.b16 %v212, %v205
    %vm297 = vcmask 785408
    %v299 = vsel %vm297, %v31, 0
    %v302 = vsel %vm297, %v32, 0
    %304 = vmatprep.subr.bf16.mxu0 0
    %305 = vmatpush1.bf16.msra.mxu0 0
    %306 = vmatprep.subr.bf16.mxu0 0
    %307 = vmatpush1.bf16.msra.mxu0 0
    %308 = vmatprep.subr.bf16.mxu0 %v249
    %309 = vmatpush1.bf16.msra.mxu0 %v248
    %310 = vmatprep.subr.bf16.mxu0 %v242
    %311 = vmatpush1.bf16.msra.mxu0 %v241
    %312 = vmatprep.subr.bf16.mxu0 %v235
    %313 = vmatpush1.bf16.msra.mxu0 %v234
    %314 = vmatprep.subr.bf16.mxu0 %v228
    %315 = vmatpush1.bf16.msra.mxu0 %v227
    %316 = vmatprep.subr.bf16.mxu0 %v221
    %317 = vmatpush1.bf16.msra.mxu0 %v220
    %318 = vmatprep.subr.bf16.mxu0 %v214
    %319 = vmatpush1.bf16.msra.mxu0 %v213
    %320 = vmatprep.subr.bf16.mxu0 0
    %321 = vmatpush2.bf16.msra.mxu0 0
    %322 = vmatprep.subr.bf16.mxu0 0
    %323 = vmatpush2.bf16.msra.mxu0 0
    %324 = vmatprep.subr.bf16.mxu0 0
    %325 = vmatpush2.bf16.msra.mxu0 0
    %326 = vmatprep.subr.bf16.mxu0 0
    %327 = vmatpush2.bf16.msra.mxu0 0
    %328 = vmatprep.subr.bf16.mxu0 0
    %329 = vmatpush2.bf16.msra.mxu0 0
    %330 = vmatprep.subr.bf16.mxu0 0
    %331 = vmatpush2.bf16.msra.mxu0 0
    %332 = vmatprep.subr.bf16.mxu0 0
    %333 = vmatpush2.bf16.msra.mxu0 0
    %334 = vmatprep.subr.bf16.mxu0 0
    %335 = vmatpush2.bf16.msra.mxu0 0
    %336 = vmatprep.mubr.bf16.mxu0 0
    %337 = vmatmul.mubr.bf16.gmra.mxu0 %v299
    %v338 = vpop.f32.mrf.mxu0
    %v339 = vadd.f32 0.5, %v338
    %v340 = vpop.f32.mrf.mxu0
    %v341 = vadd.f32 0.5, %v340
    %v342 = vpop.f32.mrf.mxu0
    %v343 = vadd.f32 0.5, %v342
    %v344 = vpop.f32.mrf.mxu0
    %v345 = vadd.f32 0.5, %v344
    %346 = vmatprep.mubr.bf16.mxu0 0
    %347 = vmatmul.mubr.bf16.gmra.mxu0 %v302
    %v348 = vpop.f32.mrf.mxu0
    %v349 = vadd.f32 0.5, %v348
    %v350 = vpop.f32.mrf.mxu0
    %v351 = vadd.f32 0.5, %v350
    %v352 = vpop.f32.mrf.mxu0
    %v353 = vadd.f32 0.5, %v352
    %v354 = vpop.f32.mrf.mxu0
    %v355 = vadd.f32 0.5, %v354
    %356 = vdwg.mxu0
    %357 = vmatprep.subr.bf16.mxu0 0
    %358 = vmatpush1.bf16.msra.mxu0 0
    %359 = vmatprep.subr.bf16.mxu0 0
    %360 = vmatpush1.bf16.msra.mxu0 0
    %361 = vmatprep.subr.bf16.mxu0 %v251
    %362 = vmatpush1.bf16.msra.mxu0 %v250
    %363 = vmatprep.subr.bf16.mxu0 %v244
    %364 = vmatpush1.bf16.msra.mxu0 %v243
    %365 = vmatprep.subr.bf16.mxu0 %v237
    %366 = vmatpush1.bf16.msra.mxu0 %v236
    %367 = vmatprep.subr.bf16.mxu0 %v230
    %368 = vmatpush1.bf16.msra.mxu0 %v229
    %369 = vmatprep.subr.bf16.mxu0 %v223
    %370 = vmatpush1.bf16.msra.mxu0 %v222
    %371 = vmatprep.subr.bf16.mxu0 %v216
    %372 = vmatpush1.bf16.msra.mxu0 %v215
    %373 = vmatprep.subr.bf16.mxu0 0
    %374 = vmatpush2.bf16.msra.mxu0 0
    %375 = vmatprep.subr.bf16.mxu0 0
    %376 = vmatpush2.bf16.msra.mxu0 0
    %377 = vmatprep.subr.bf16.mxu0 0
    %378 = vmatpush2.bf16.msra.mxu0 0
    %379 = vmatprep.subr.bf16.mxu0 0
    %380 = vmatpush2.bf16.msra.mxu0 0
    %381 = vmatprep.subr.bf16.mxu0 0
    %382 = vmatpush2.bf16.msra.mxu0 0
    %383 = vmatprep.subr.bf16.mxu0 0
    %384 = vmatpush2.bf16.msra.mxu0 0
    %385 = vmatprep.subr.bf16.mxu0 0
    %386 = vmatpush2.bf16.msra.mxu0 0
    %387 = vmatprep.subr.bf16.mxu0 0
    %388 = vmatpush2.bf16.msra.mxu0 0
    %389 = vmatprep.mubr.bf16.mxu0 0
    %390 = vmatmul.mubr.bf16.gmra.mxu0 %v299
    %v391 = vpop.f32.mrf.mxu0
    %v392 = vadd.f32 0.5, %v391
    %v393 = vpop.f32.mrf.mxu0
    %v394 = vadd.f32 0.5, %v393
    %v395 = vpop.f32.mrf.mxu0
    %v396 = vadd.f32 0.5, %v395
    %v397 = vpop.f32.mrf.mxu0
    %v398 = vadd.f32 0.5, %v397
    %399 = vmatprep.mubr.bf16.mxu0 0
    %400 = vmatmul.mubr.bf16.gmra.mxu0 %v302
    %v401 = vpop.f32.mrf.mxu0
    %v402 = vadd.f32 0.5, %v401
    %v403 = vpop.f32.mrf.mxu0
    %v404 = vadd.f32 0.5, %v403
    %v405 = vpop.f32.mrf.mxu0
    %v406 = vadd.f32 0.5, %v405
    %v407 = vpop.f32.mrf.mxu0
    %v408 = vadd.f32 0.5, %v407
    %409 = vdwg.mxu0
    %410 = vmatprep.subr.bf16.mxu0 0
    %411 = vmatpush1.bf16.msra.mxu0 0
    %412 = vmatprep.subr.bf16.mxu0 0
    %413 = vmatpush1.bf16.msra.mxu0 0
    %414 = vmatprep.subr.bf16.mxu0 %v253
    %415 = vmatpush1.bf16.msra.mxu0 %v252
    %416 = vmatprep.subr.bf16.mxu0 %v246
    %417 = vmatpush1.bf16.msra.mxu0 %v245
    %418 = vmatprep.subr.bf16.mxu0 %v239
    %419 = vmatpush1.bf16.msra.mxu0 %v238
    %420 = vmatprep.subr.bf16.mxu0 %v232
    %421 = vmatpush1.bf16.msra.mxu0 %v231
    %422 = vmatprep.subr.bf16.mxu0 %v225
    %423 = vmatpush1.bf16.msra.mxu0 %v224
    %424 = vmatprep.subr.bf16.mxu0 %v218
    %425 = vmatpush1.bf16.msra.mxu0 %v217
    %426 = vmatprep.subr.bf16.mxu0 0
    %427 = vmatpush2.bf16.msra.mxu0 0
    %428 = vmatprep.subr.bf16.mxu0 0
    %429 = vmatpush2.bf16.msra.mxu0 0
    %430 = vmatprep.subr.bf16.mxu0 0
    %431 = vmatpush2.bf16.msra.mxu0 0
    %432 = vmatprep.subr.bf16.mxu0 0
    %433 = vmatpush2.bf16.msra.mxu0 0
    %434 = vmatprep.subr.bf16.mxu0 0
    %435 = vmatpush2.bf16.msra.mxu0 0
    %436 = vmatprep.subr.bf16.mxu0 0
    %437 = vmatpush2.bf16.msra.mxu0 0
    %438 = vmatprep.subr.bf16.mxu0 0
    %439 = vmatpush2.bf16.msra.mxu0 0
    %440 = vmatprep.subr.bf16.mxu0 0
    %441 = vmatpush2.bf16.msra.mxu0 0
    %442 = vmatprep.mubr.bf16.mxu0 0
    %443 = vmatmul.mubr.bf16.gmra.mxu0 %v299
    %v444 = vpop.f32.mrf.mxu0
    %v445 = vadd.f32 0.5, %v444
    %v446 = vpop.f32.mrf.mxu0
    %v447 = vadd.f32 0.5, %v446
    %v448 = vpop.f32.mrf.mxu0
    %v449 = vadd.f32 0.5, %v448
    %v450 = vpop.f32.mrf.mxu0
    %v451 = vadd.f32 0.5, %v450
    %452 = vmatprep.mubr.bf16.mxu0 0
    %453 = vmatmul.mubr.bf16.gmra.mxu0 %v302
    %v454 = vpop.f32.mrf.mxu0
    %v455 = vadd.f32 0.5, %v454
    %v456 = vpop.f32.mrf.mxu0
    %v457 = vadd.f32 0.5, %v456
    %v458 = vpop.f32.mrf.mxu0
    %v459 = vadd.f32 0.5, %v458
    %v460 = vpop.f32.mrf.mxu0
    %v461 = vadd.f32 0.5, %v460
    %462 = vdwg.mxu0
    %463 = vmatprep.subr.bf16.mxu0 0
    %464 = vmatpush1.bf16.msra.mxu0 0
    %465 = vmatprep.subr.bf16.mxu0 0
    %466 = vmatpush1.bf16.msra.mxu0 0
    %467 = vmatprep.subr.bf16.mxu0 0
    %468 = vmatpush1.bf16.msra.mxu0 %v254
    %469 = vmatprep.subr.bf16.mxu0 0
    %470 = vmatpush1.bf16.msra.mxu0 %v247
    %471 = vmatprep.subr.bf16.mxu0 0
    %472 = vmatpush1.bf16.msra.mxu0 %v240
    %473 = vmatprep.subr.bf16.mxu0 0
    %474 = vmatpush1.bf16.msra.mxu0 %v233
    %475 = vmatprep.subr.bf16.mxu0 0
    %476 = vmatpush1.bf16.msra.mxu0 %v226
    %477 = vmatprep.subr.bf16.mxu0 0
    %478 = vmatpush1.bf16.msra.mxu0 %v219
    %479 = vmatprep.subr.bf16.mxu0 0
    %480 = vmatpush2.bf16.msra.mxu0 0
    %481 = vmatprep.subr.bf16.mxu0 0
    %482 = vmatpush2.bf16.msra.mxu0 0
    %483 = vmatprep.subr.bf16.mxu0 0
    %484 = vmatpush2.bf16.msra.mxu0 0
    %485 = vmatprep.subr.bf16.mxu0 0
    %486 = vmatpush2.bf16.msra.mxu0 0
    %487 = vmatprep.subr.bf16.mxu0 0
    %488 = vmatpush2.bf16.msra.mxu0 0
    %489 = vmatprep.subr.bf16.mxu0 0
    %490 = vmatpush2.bf16.msra.mxu0 0
    %491 = vmatprep.subr.bf16.mxu0 0
    %492 = vmatpush2.bf16.msra.mxu0 0
    %493 = vmatprep.subr.bf16.mxu0 0
    %494 = vmatpush2.bf16.msra.mxu0 0
    %495 = vmatprep.mubr.bf16.mxu0 0
    %496 = vmatmul.mubr.bf16.gmra.mxu0 %v299
    %v497 = vpop.f32.mrf.mxu0
    %v498 = vadd.f32 0.5, %v497
    %v499 = vpop.f32.mrf.mxu0
    %v500 = vpop.f32.mrf.mxu0
    %v501 = vadd.f32 0.5, %v500
    %v502 = vpop.f32.mrf.mxu0
    %503 = vmatprep.mubr.bf16.mxu0 0
    %504 = vmatmul.mubr.bf16.gmra.mxu0 %v302
    %v505 = vpop.f32.mrf.mxu0
    %v506 = vadd.f32 0.5, %v505
    %v507 = vpop.f32.mrf.mxu0
    %v508 = vpop.f32.mrf.mxu0
    %v509 = vadd.f32 0.5, %v508
    %v510 = vpop.f32.mrf.mxu0
    %511 = vdwg.mxu0
    %v512 = vfloor.f32 %v339
    %v513 = vfloor.f32 %v341
    %v514 = vfloor.f32 %v392
    %v515 = vfloor.f32 %v394
    %v516 = vfloor.f32 %v445
    %v517 = vfloor.f32 %v447
    %v518 = vfloor.f32 %v498
    %v519 = vfloor.f32 %v343
    %v520 = vfloor.f32 %v345
    %v521 = vfloor.f32 %v396
    %v522 = vfloor.f32 %v398
    %v523 = vfloor.f32 %v449
    %v524 = vfloor.f32 %v451
    %v525 = vfloor.f32 %v501
    %v526 = vfloor.f32 %v349
    %v527 = vfloor.f32 %v351
    %v528 = vfloor.f32 %v402
    %v529 = vfloor.f32 %v404
    %v530 = vfloor.f32 %v455
    %v531 = vfloor.f32 %v457
    %v532 = vfloor.f32 %v506
    %v533 = vfloor.f32 %v353
    %v534 = vfloor.f32 %v355
    %v535 = vfloor.f32 %v406
    %v536 = vfloor.f32 %v408
    %v537 = vfloor.f32 %v459
    %v538 = vfloor.f32 %v461
    %v539 = vfloor.f32 %v509
    %v540 = vmax.f32 %v512, 0.0
    %v541 = vmax.f32 %v513, 0.0
    %v542 = vmax.f32 %v514, 0.0
    %v543 = vmax.f32 %v515, 0.0
    %v544 = vmax.f32 %v516, 0.0
    %v545 = vmax.f32 %v517, 0.0
    %v546 = vmax.f32 %v518, 0.0
    %v547 = vmax.f32 %v519, 0.0
    %v548 = vmax.f32 %v520, 0.0
    %v549 = vmax.f32 %v521, 0.0
    %v550 = vmax.f32 %v522, 0.0
    %v551 = vmax.f32 %v523, 0.0
    %v552 = vmax.f32 %v524, 0.0
    %v553 = vmax.f32 %v525, 0.0
    %v554 = vmax.f32 %v526, 0.0
    %v555 = vmax.f32 %v527, 0.0
    %v556 = vmax.f32 %v528, 0.0
    %v557 = vmax.f32 %v529, 0.0
    %v558 = vmax.f32 %v530, 0.0
    %v559 = vmax.f32 %v531, 0.0
    %v560 = vmax.f32 %v532, 0.0
    %v561 = vmax.f32 %v533, 0.0
    %v562 = vmax.f32 %v534, 0.0
    %v563 = vmax.f32 %v535, 0.0
    %v564 = vmax.f32 %v536, 0.0
    %v565 = vmax.f32 %v537, 0.0
    %v566 = vmax.f32 %v538, 0.0
    %v567 = vmax.f32 %v539, 0.0
    %v568 = vmin.f32 %v540, 255.0
    %v569 = vmin.f32 %v541, 255.0
    %v570 = vmin.f32 %v542, 255.0
    %v571 = vmin.f32 %v543, 255.0
    %v572 = vmin.f32 %v544, 255.0
    %v573 = vmin.f32 %v545, 255.0
    %v574 = vmin.f32 %v546, 255.0
    %v575 = vmin.f32 %v547, 255.0
    %v576 = vmin.f32 %v548, 255.0
    %v577 = vmin.f32 %v549, 255.0
    %v578 = vmin.f32 %v550, 255.0
    %v579 = vmin.f32 %v551, 255.0
    %v580 = vmin.f32 %v552, 255.0
    %v581 = vmin.f32 %v553, 255.0
    %v582 = vmin.f32 %v554, 255.0
    %v583 = vmin.f32 %v555, 255.0
    %v584 = vmin.f32 %v556, 255.0
    %v585 = vmin.f32 %v557, 255.0
    %v586 = vmin.f32 %v558, 255.0
    %v587 = vmin.f32 %v559, 255.0
    %v588 = vmin.f32 %v560, 255.0
    %v589 = vmin.f32 %v561, 255.0
    %v590 = vmin.f32 %v562, 255.0
    %v591 = vmin.f32 %v563, 255.0
    %v592 = vmin.f32 %v564, 255.0
    %v593 = vmin.f32 %v565, 255.0
    %v594 = vmin.f32 %v566, 255.0
    %v595 = vmin.f32 %v567, 255.0
    %v596 = vld [vmem:[%s2] sm:$0xf]
    %v597 = vld [vmem:[%s2 + $0x4] sm:$0xf]
    %v598 = vld [vmem:[%s2 + $0x8] sm:$0xf]
    %v599 = vld [vmem:[%s2 + $0xc] sm:$0xf]
    %v600 = vld [vmem:[%s2 + $0x10] sm:$0xf]
    %v601 = vld [vmem:[%s2 + $0x14] sm:$0xf]
    %v602 = vld [vmem:[%s2 + $0x18] sm:$0xf]
    %v603 = vld [vmem:[%s2 + $0x1c] sm:$0xf]
    %v604 = vld [vmem:[%s2 + $0x20] sm:$0xf]
    %v605 = vld [vmem:[%s2 + $0x24] sm:$0xf]
    %v606 = vld [vmem:[%s2 + $0x28] sm:$0xf]
    %v607 = vld [vmem:[%s2 + $0x2c] sm:$0xf]
    %v608 = vld [vmem:[%s2 + $0x30] sm:$0xf]
    %v609 = vld [vmem:[%s2 + $0x34] sm:$0xf]
    %v610 = vld [vmem:[%s2 + $0x38] sm:$0xf]
    %v611 = vld [vmem:[%s2 + $0x3c] sm:$0xf]
    %v612 = vld [vmem:[%s2 + $0x40] sm:$0xf]
    %v613 = vld [vmem:[%s2 + $0x44] sm:$0xf]
    %v614 = vld [vmem:[%s2 + $0x48] sm:$0xf]
    %v615 = vld [vmem:[%s2 + $0x4c] sm:$0xf]
    %v616 = vld [vmem:[%s2 + $0x50] sm:$0xf]
    %v617 = vld [vmem:[%s2 + $0x54] sm:$0xf]
    %v618 = vld [vmem:[%s2 + $0x58] sm:$0xf]
    %v619 = vld [vmem:[%s2 + $0x5c] sm:$0xf]
    %v620 = vld [vmem:[%s2 + $0x60] sm:$0xf]
    %v621 = vld [vmem:[%s2 + $0x64] sm:$0xf]
    %v622 = vld [vmem:[%s2 + $0x68] sm:$0xf]
    %v623 = vld [vmem:[%s2 + $0x6c] sm:$0xf]
    %v624 = vpack.c.bf16 %v575, %v568
    %v625 = vpack.c.bf16 %v576, %v569
    %v626 = vpack.c.bf16 %v577, %v570
    %v627 = vpack.c.bf16 %v578, %v571
    %v628 = vpack.c.bf16 %v579, %v572
    %v629 = vpack.c.bf16 %v580, %v573
    %v630 = vpack.c.bf16 %v581, %v574
    %v631 = vpack.c.bf16 %v589, %v582
    %v632 = vpack.c.bf16 %v590, %v583
    %v633 = vpack.c.bf16 %v591, %v584
    %v634 = vpack.c.bf16 %v592, %v585
    %v635 = vpack.c.bf16 %v593, %v586
    %v636 = vpack.c.bf16 %v594, %v587
    %v637 = vpack.c.bf16 %v595, %v588
    %v666 = vunpack.c.l.b16 %v596
    %v667 = vunpack.c.l.b16 %v597
    %v668 = vunpack.c.l.b16 %v598
    %v669 = vunpack.c.l.b16 %v599
    %v670 = vunpack.c.l.b16 %v600
    %v671 = vunpack.c.l.b16 %v601
    %v672 = vunpack.c.l.b16 %v602
    %v673 = vunpack.c.l.b16 %v603
    %v674 = vunpack.c.l.b16 %v604
    %v675 = vunpack.c.l.b16 %v605
    %v676 = vunpack.c.l.b16 %v606
    %v677 = vunpack.c.l.b16 %v607
    %v678 = vunpack.c.l.b16 %v608
    %v679 = vunpack.c.l.b16 %v609
    %v680 = vunpack.c.l.b16 %v610
    %v681 = vunpack.c.l.b16 %v611
    %v682 = vunpack.c.l.b16 %v612
    %v683 = vunpack.c.l.b16 %v613
    %v684 = vunpack.c.l.b16 %v614
    %v685 = vunpack.c.l.b16 %v615
    %v686 = vunpack.c.l.b16 %v616
    %v687 = vunpack.c.l.b16 %v617
    %v688 = vunpack.c.l.b16 %v618
    %v689 = vunpack.c.l.b16 %v619
    %v690 = vunpack.c.l.b16 %v620
    %v691 = vunpack.c.l.b16 %v621
    %v692 = vunpack.c.l.b16 %v622
    %v693 = vunpack.c.l.b16 %v623
    %v694 = vpack.c.b16 %v667, %v666
    %v695 = vpack.c.b16 %v669, %v668
    %v696 = vpack.c.b16 %v671, %v670
    %v697 = vpack.c.b16 %v673, %v672
    %v698 = vpack.c.b16 %v675, %v674
    %v699 = vpack.c.b16 %v677, %v676
    %v700 = vpack.c.b16 %v679, %v678
    %v701 = vpack.c.b16 %v681, %v680
    %v702 = vpack.c.b16 %v683, %v682
    %v703 = vpack.c.b16 %v685, %v684
    %v704 = vpack.c.b16 %v687, %v686
    %v705 = vpack.c.b16 %v689, %v688
    %v706 = vpack.c.b16 %v691, %v690
    %v707 = vpack.c.b16 %v693, %v692
    %vm708 = vcmask 261120
    %v710 = vsel %vm708, %v694, 0
    %v713 = vsel %vm708, %v695, 0
    %v716 = vsel %vm708, %v696, 0
    %v719 = vsel %vm708, %v697, 0
    %v722 = vsel %vm708, %v698, 0
    %v725 = vsel %vm708, %v699, 0
    %v728 = vsel %vm708, %v700, 0
    %v731 = vsel %vm708, %v701, 0
    %v734 = vsel %vm708, %v702, 0
    %v737 = vsel %vm708, %v703, 0
    %v740 = vsel %vm708, %v704, 0
    %v743 = vsel %vm708, %v705, 0
    %v746 = vsel %vm708, %v706, 0
    %v749 = vsel %vm708, %v707, 0
    %751 = vmatprep.subr.bf16.mxu0 0
    %752 = vmatpush1.bf16.msra.mxu0 0
    %753 = vmatprep.subr.bf16.mxu0 0
    %754 = vmatpush1.bf16.msra.mxu0 0
    %755 = vmatprep.subr.bf16.mxu0 0
    %756 = vmatpush1.bf16.msra.mxu0 0
    %757 = vmatprep.subr.bf16.mxu0 0
    %758 = vmatpush1.bf16.msra.mxu0 0
    %759 = vmatprep.subr.bf16.mxu0 0
    %760 = vmatpush1.bf16.msra.mxu0 0
    %761 = vmatprep.subr.bf16.mxu0 0
    %762 = vmatpush1.bf16.msra.mxu0 0
    %763 = vmatprep.subr.bf16.mxu0 %v632
    %764 = vmatpush1.bf16.msra.mxu0 %v631
    %765 = vmatprep.subr.bf16.mxu0 %v625
    %766 = vmatpush1.bf16.msra.mxu0 %v624
    %767 = vmatprep.subr.bf16.mxu0 0
    %768 = vmatpush2.bf16.msra.mxu0 0
    %769 = vmatprep.subr.bf16.mxu0 0
    %770 = vmatpush2.bf16.msra.mxu0 0
    %771 = vmatprep.subr.bf16.mxu0 0
    %772 = vmatpush2.bf16.msra.mxu0 0
    %773 = vmatprep.subr.bf16.mxu0 0
    %774 = vmatpush2.bf16.msra.mxu0 0
    %775 = vmatprep.subr.bf16.mxu0 0
    %776 = vmatpush2.bf16.msra.mxu0 0
    %777 = vmatprep.subr.bf16.mxu0 0
    %778 = vmatpush2.bf16.msra.mxu0 0
    %779 = vmatprep.subr.bf16.mxu0 0
    %780 = vmatpush2.bf16.msra.mxu0 0
    %781 = vmatprep.subr.bf16.mxu0 0
    %782 = vmatpush2.bf16.msra.mxu0 0
    %783 = vmatprep.mubr.bf16.mxu0 0
    %784 = vmatmul.mubr.bf16.gmra.mxu0 %v710
    %v785 = vpop.f32.mrf.mxu0
    %v786 = vadd.f32 0.5, %v785
    %v787 = vpop.f32.mrf.mxu0
    %v788 = vadd.f32 0.5, %v787
    %v789 = vpop.f32.mrf.mxu0
    %v790 = vadd.f32 0.5, %v789
    %v791 = vpop.f32.mrf.mxu0
    %v792 = vadd.f32 0.5, %v791
    %793 = vmatprep.mubr.bf16.mxu0 0
    %794 = vmatmul.mubr.bf16.gmra.mxu0 %v713
    %v795 = vpop.f32.mrf.mxu0
    %v796 = vadd.f32 0.5, %v795
    %v797 = vpop.f32.mrf.mxu0
    %v798 = vadd.f32 0.5, %v797
    %v799 = vpop.f32.mrf.mxu0
    %v800 = vadd.f32 0.5, %v799
    %v801 = vpop.f32.mrf.mxu0
    %v802 = vadd.f32 0.5, %v801
    %803 = vmatprep.mubr.bf16.mxu0 0
    %804 = vmatmul.mubr.bf16.gmra.mxu0 %v716
    %v805 = vpop.f32.mrf.mxu0
    %v806 = vadd.f32 0.5, %v805
    %v807 = vpop.f32.mrf.mxu0
    %v808 = vadd.f32 0.5, %v807
    %v809 = vpop.f32.mrf.mxu0
    %v810 = vadd.f32 0.5, %v809
    %v811 = vpop.f32.mrf.mxu0
    %v812 = vadd.f32 0.5, %v811
    %813 = vmatprep.mubr.bf16.mxu0 0
    %814 = vmatmul.mubr.bf16.gmra.mxu0 %v719
    %v815 = vpop.f32.mrf.mxu0
    %v816 = vadd.f32 0.5, %v815
    %v817 = vpop.f32.mrf.mxu0
    %v818 = vadd.f32 0.5, %v817
    %v819 = vpop.f32.mrf.mxu0
    %v820 = vadd.f32 0.5, %v819
    %v821 = vpop.f32.mrf.mxu0
    %v822 = vadd.f32 0.5, %v821
    %823 = vmatprep.mubr.bf16.mxu0 0
    %824 = vmatmul.mubr.bf16.gmra.mxu0 %v722
    %v825 = vpop.f32.mrf.mxu0
    %v826 = vadd.f32 0.5, %v825
    %v827 = vpop.f32.mrf.mxu0
    %v828 = vadd.f32 0.5, %v827
    %v829 = vpop.f32.mrf.mxu0
    %v830 = vadd.f32 0.5, %v829
    %v831 = vpop.f32.mrf.mxu0
    %v832 = vadd.f32 0.5, %v831
    %833 = vmatprep.mubr.bf16.mxu0 0
    %834 = vmatmul.mubr.bf16.gmra.mxu0 %v725
    %v835 = vpop.f32.mrf.mxu0
    %v836 = vadd.f32 0.5, %v835
    %v837 = vpop.f32.mrf.mxu0
    %v838 = vadd.f32 0.5, %v837
    %v839 = vpop.f32.mrf.mxu0
    %v840 = vadd.f32 0.5, %v839
    %v841 = vpop.f32.mrf.mxu0
    %v842 = vadd.f32 0.5, %v841
    %843 = vmatprep.mubr.bf16.mxu0 0
    %844 = vmatmul.mubr.bf16.gmra.mxu0 %v728
    %v845 = vpop.f32.mrf.mxu0
    %v846 = vadd.f32 0.5, %v845
    %v847 = vpop.f32.mrf.mxu0
    %v848 = vadd.f32 0.5, %v847
    %v849 = vpop.f32.mrf.mxu0
    %v850 = vadd.f32 0.5, %v849
    %v851 = vpop.f32.mrf.mxu0
    %v852 = vadd.f32 0.5, %v851
    %853 = vmatprep.mubr.bf16.mxu0 0
    %854 = vmatmul.mubr.bf16.gmra.mxu0 %v731
    %v855 = vpop.f32.mrf.mxu0
    %v856 = vadd.f32 0.5, %v855
    %v857 = vpop.f32.mrf.mxu0
    %v858 = vadd.f32 0.5, %v857
    %v859 = vpop.f32.mrf.mxu0
    %v860 = vadd.f32 0.5, %v859
    %v861 = vpop.f32.mrf.mxu0
    %v862 = vadd.f32 0.5, %v861
    %863 = vmatprep.mubr.bf16.mxu0 0
    %864 = vmatmul.mubr.bf16.gmra.mxu0 %v734
    %v865 = vpop.f32.mrf.mxu0
    %v866 = vadd.f32 0.5, %v865
    %v867 = vpop.f32.mrf.mxu0
    %v868 = vadd.f32 0.5, %v867
    %v869 = vpop.f32.mrf.mxu0
    %v870 = vadd.f32 0.5, %v869
    %v871 = vpop.f32.mrf.mxu0
    %v872 = vadd.f32 0.5, %v871
    %873 = vmatprep.mubr.bf16.mxu0 0
    %874 = vmatmul.mubr.bf16.gmra.mxu0 %v737
    %v875 = vpop.f32.mrf.mxu0
    %v876 = vadd.f32 0.5, %v875
    %v877 = vpop.f32.mrf.mxu0
    %v878 = vadd.f32 0.5, %v877
    %v879 = vpop.f32.mrf.mxu0
    %v880 = vadd.f32 0.5, %v879
    %v881 = vpop.f32.mrf.mxu0
    %v882 = vadd.f32 0.5, %v881
    %883 = vmatprep.mubr.bf16.mxu0 0
    %884 = vmatmul.mubr.bf16.gmra.mxu0 %v740
    %v885 = vpop.f32.mrf.mxu0
    %v886 = vadd.f32 0.5, %v885
    %v887 = vpop.f32.mrf.mxu0
    %v888 = vadd.f32 0.5, %v887
    %v889 = vpop.f32.mrf.mxu0
    %v890 = vadd.f32 0.5, %v889
    %v891 = vpop.f32.mrf.mxu0
    %v892 = vadd.f32 0.5, %v891
    %893 = vmatprep.mubr.bf16.mxu0 0
    %894 = vmatmul.mubr.bf16.gmra.mxu0 %v743
    %v895 = vpop.f32.mrf.mxu0
    %v896 = vadd.f32 0.5, %v895
    %v897 = vpop.f32.mrf.mxu0
    %v898 = vadd.f32 0.5, %v897
    %v899 = vpop.f32.mrf.mxu0
    %v900 = vadd.f32 0.5, %v899
    %v901 = vpop.f32.mrf.mxu0
    %v902 = vadd.f32 0.5, %v901
    %903 = vmatprep.mubr.bf16.mxu0 0
    %904 = vmatmul.mubr.bf16.gmra.mxu0 %v746
    %v905 = vpop.f32.mrf.mxu0
    %v906 = vadd.f32 0.5, %v905
    %v907 = vpop.f32.mrf.mxu0
    %v908 = vadd.f32 0.5, %v907
    %v909 = vpop.f32.mrf.mxu0
    %v910 = vadd.f32 0.5, %v909
    %v911 = vpop.f32.mrf.mxu0
    %v912 = vadd.f32 0.5, %v911
    %913 = vmatprep.mubr.bf16.mxu0 0
    %914 = vmatmul.mubr.bf16.gmra.mxu0 %v749
    %v915 = vpop.f32.mrf.mxu0
    %v916 = vadd.f32 0.5, %v915
    %v917 = vpop.f32.mrf.mxu0
    %v918 = vadd.f32 0.5, %v917
    %v919 = vpop.f32.mrf.mxu0
    %v920 = vadd.f32 0.5, %v919
    %v921 = vpop.f32.mrf.mxu0
    %v922 = vadd.f32 0.5, %v921
    %923 = vdwg.mxu0
    %924 = vmatprep.subr.bf16.mxu0 0
    %925 = vmatpush1.bf16.msra.mxu0 0
    %926 = vmatprep.subr.bf16.mxu0 0
    %927 = vmatpush1.bf16.msra.mxu0 0
    %928 = vmatprep.subr.bf16.mxu0 0
    %929 = vmatpush1.bf16.msra.mxu0 0
    %930 = vmatprep.subr.bf16.mxu0 0
    %931 = vmatpush1.bf16.msra.mxu0 0
    %932 = vmatprep.subr.bf16.mxu0 0
    %933 = vmatpush1.bf16.msra.mxu0 0
    %934 = vmatprep.subr.bf16.mxu0 0
    %935 = vmatpush1.bf16.msra.mxu0 0
    %936 = vmatprep.subr.bf16.mxu0 %v634
    %937 = vmatpush1.bf16.msra.mxu0 %v633
    %938 = vmatprep.subr.bf16.mxu0 %v627
    %939 = vmatpush1.bf16.msra.mxu0 %v626
    %940 = vmatprep.subr.bf16.mxu0 0
    %941 = vmatpush2.bf16.msra.mxu0 0
    %942 = vmatprep.subr.bf16.mxu0 0
    %943 = vmatpush2.bf16.msra.mxu0 0
    %944 = vmatprep.subr.bf16.mxu0 0
    %945 = vmatpush2.bf16.msra.mxu0 0
    %946 = vmatprep.subr.bf16.mxu0 0
    %947 = vmatpush2.bf16.msra.mxu0 0
    %948 = vmatprep.subr.bf16.mxu0 0
    %949 = vmatpush2.bf16.msra.mxu0 0
    %950 = vmatprep.subr.bf16.mxu0 0
    %951 = vmatpush2.bf16.msra.mxu0 0
    %952 = vmatprep.subr.bf16.mxu0 0
    %953 = vmatpush2.bf16.msra.mxu0 0
    %954 = vmatprep.subr.bf16.mxu0 0
    %955 = vmatpush2.bf16.msra.mxu0 0
    %956 = vmatprep.mubr.bf16.mxu0 0
    %957 = vmatmul.mubr.bf16.gmra.mxu0 %v710
    %v958 = vpop.f32.mrf.mxu0
    %v959 = vadd.f32 0.5, %v958
    %v960 = vpop.f32.mrf.mxu0
    %v961 = vadd.f32 0.5, %v960
    %v962 = vpop.f32.mrf.mxu0
    %v963 = vadd.f32 0.5, %v962
    %v964 = vpop.f32.mrf.mxu0
    %v965 = vadd.f32 0.5, %v964
    %966 = vmatprep.mubr.bf16.mxu0 0
    %967 = vmatmul.mubr.bf16.gmra.mxu0 %v713
    %v968 = vpop.f32.mrf.mxu0
    %v969 = vadd.f32 0.5, %v968
    %v970 = vpop.f32.mrf.mxu0
    %v971 = vadd.f32 0.5, %v970
    %v972 = vpop.f32.mrf.mxu0
    %v973 = vadd.f32 0.5, %v972
    %v974 = vpop.f32.mrf.mxu0
    %v975 = vadd.f32 0.5, %v974
    %976 = vmatprep.mubr.bf16.mxu0 0
    %977 = vmatmul.mubr.bf16.gmra.mxu0 %v716
    %v978 = vpop.f32.mrf.mxu0
    %v979 = vadd.f32 0.5, %v978
    %v980 = vpop.f32.mrf.mxu0
    %v981 = vadd.f32 0.5, %v980
    %v982 = vpop.f32.mrf.mxu0
    %v983 = vadd.f32 0.5, %v982
    %v984 = vpop.f32.mrf.mxu0
    %v985 = vadd.f32 0.5, %v984
    %986 = vmatprep.mubr.bf16.mxu0 0
    %987 = vmatmul.mubr.bf16.gmra.mxu0 %v719
    %v988 = vpop.f32.mrf.mxu0
    %v989 = vadd.f32 0.5, %v988
    %v990 = vpop.f32.mrf.mxu0
    %v991 = vadd.f32 0.5, %v990
    %v992 = vpop.f32.mrf.mxu0
    %v993 = vadd.f32 0.5, %v992
    %v994 = vpop.f32.mrf.mxu0
    %v995 = vadd.f32 0.5, %v994
    %996 = vmatprep.mubr.bf16.mxu0 0
    %997 = vmatmul.mubr.bf16.gmra.mxu0 %v722
    %v998 = vpop.f32.mrf.mxu0
    %v999 = vadd.f32 0.5, %v998
    %v1000 = vpop.f32.mrf.mxu0
    %v1001 = vadd.f32 0.5, %v1000
    %v1002 = vpop.f32.mrf.mxu0
    %v1003 = vadd.f32 0.5, %v1002
    %v1004 = vpop.f32.mrf.mxu0
    %v1005 = vadd.f32 0.5, %v1004
    %1006 = vmatprep.mubr.bf16.mxu0 0
    %1007 = vmatmul.mubr.bf16.gmra.mxu0 %v725
    %v1008 = vpop.f32.mrf.mxu0
    %v1009 = vadd.f32 0.5, %v1008
    %v1010 = vpop.f32.mrf.mxu0
    %v1011 = vadd.f32 0.5, %v1010
    %v1012 = vpop.f32.mrf.mxu0
    %v1013 = vadd.f32 0.5, %v1012
    %v1014 = vpop.f32.mrf.mxu0
    %v1015 = vadd.f32 0.5, %v1014
    %1016 = vmatprep.mubr.bf16.mxu0 0
    %1017 = vmatmul.mubr.bf16.gmra.mxu0 %v728
    %v1018 = vpop.f32.mrf.mxu0
    %v1019 = vadd.f32 0.5, %v1018
    %v1020 = vpop.f32.mrf.mxu0
    %v1021 = vadd.f32 0.5, %v1020
    %v1022 = vpop.f32.mrf.mxu0
    %v1023 = vadd.f32 0.5, %v1022
    %v1024 = vpop.f32.mrf.mxu0
    %v1025 = vadd.f32 0.5, %v1024
    %1026 = vmatprep.mubr.bf16.mxu0 0
    %1027 = vmatmul.mubr.bf16.gmra.mxu0 %v731
    %v1028 = vpop.f32.mrf.mxu0
    %v1029 = vadd.f32 0.5, %v1028
    %v1030 = vpop.f32.mrf.mxu0
    %v1031 = vadd.f32 0.5, %v1030
    %v1032 = vpop.f32.mrf.mxu0
    %v1033 = vadd.f32 0.5, %v1032
    %v1034 = vpop.f32.mrf.mxu0
    %v1035 = vadd.f32 0.5, %v1034
    %1036 = vmatprep.mubr.bf16.mxu0 0
    %1037 = vmatmul.mubr.bf16.gmra.mxu0 %v734
    %v1038 = vpop.f32.mrf.mxu0
    %v1039 = vadd.f32 0.5, %v1038
    %v1040 = vpop.f32.mrf.mxu0
    %v1041 = vadd.f32 0.5, %v1040
    %v1042 = vpop.f32.mrf.mxu0
    %v1043 = vadd.f32 0.5, %v1042
    %v1044 = vpop.f32.mrf.mxu0
    %v1045 = vadd.f32 0.5, %v1044
    %1046 = vmatprep.mubr.bf16.mxu0 0
    %1047 = vmatmul.mubr.bf16.gmra.mxu0 %v737
    %v1048 = vpop.f32.mrf.mxu0
    %v1049 = vadd.f32 0.5, %v1048
    %v1050 = vpop.f32.mrf.mxu0
    %v1051 = vadd.f32 0.5, %v1050
    %v1052 = vpop.f32.mrf.mxu0
    %v1053 = vadd.f32 0.5, %v1052
    %v1054 = vpop.f32.mrf.mxu0
    %v1055 = vadd.f32 0.5, %v1054
    %1056 = vmatprep.mubr.bf16.mxu0 0
    %1057 = vmatmul.mubr.bf16.gmra.mxu0 %v740
    %v1058 = vpop.f32.mrf.mxu0
    %v1059 = vadd.f32 0.5, %v1058
    %v1060 = vpop.f32.mrf.mxu0
    %v1061 = vadd.f32 0.5, %v1060
    %v1062 = vpop.f32.mrf.mxu0
    %v1063 = vadd.f32 0.5, %v1062
    %v1064 = vpop.f32.mrf.mxu0
    %v1065 = vadd.f32 0.5, %v1064
    %1066 = vmatprep.mubr.bf16.mxu0 0
    %1067 = vmatmul.mubr.bf16.gmra.mxu0 %v743
    %v1068 = vpop.f32.mrf.mxu0
    %v1069 = vadd.f32 0.5, %v1068
    %v1070 = vpop.f32.mrf.mxu0
    %v1071 = vadd.f32 0.5, %v1070
    %v1072 = vpop.f32.mrf.mxu0
    %v1073 = vadd.f32 0.5, %v1072
    %v1074 = vpop.f32.mrf.mxu0
    %v1075 = vadd.f32 0.5, %v1074
    %1076 = vmatprep.mubr.bf16.mxu0 0
    %1077 = vmatmul.mubr.bf16.gmra.mxu0 %v746
    %v1078 = vpop.f32.mrf.mxu0
    %v1079 = vadd.f32 0.5, %v1078
    %v1080 = vpop.f32.mrf.mxu0
    %v1081 = vadd.f32 0.5, %v1080
    %v1082 = vpop.f32.mrf.mxu0
    %v1083 = vadd.f32 0.5, %v1082
    %v1084 = vpop.f32.mrf.mxu0
    %v1085 = vadd.f32 0.5, %v1084
    %1086 = vmatprep.mubr.bf16.mxu0 0
    %1087 = vmatmul.mubr.bf16.gmra.mxu0 %v749
    %v1088 = vpop.f32.mrf.mxu0
    %v1089 = vadd.f32 0.5, %v1088
    %v1090 = vpop.f32.mrf.mxu0
    %v1091 = vadd.f32 0.5, %v1090
    %v1092 = vpop.f32.mrf.mxu0
    %v1093 = vadd.f32 0.5, %v1092
    %v1094 = vpop.f32.mrf.mxu0
    %v1095 = vadd.f32 0.5, %v1094
    %1096 = vdwg.mxu0
    %1097 = vmatprep.subr.bf16.mxu0 0
    %1098 = vmatpush1.bf16.msra.mxu0 0
    %1099 = vmatprep.subr.bf16.mxu0 0
    %1100 = vmatpush1.bf16.msra.mxu0 0
    %1101 = vmatprep.subr.bf16.mxu0 0
    %1102 = vmatpush1.bf16.msra.mxu0 0
    %1103 = vmatprep.subr.bf16.mxu0 0
    %1104 = vmatpush1.bf16.msra.mxu0 0
    %1105 = vmatprep.subr.bf16.mxu0 0
    %1106 = vmatpush1.bf16.msra.mxu0 0
    %1107 = vmatprep.subr.bf16.mxu0 0
    %1108 = vmatpush1.bf16.msra.mxu0 0
    %1109 = vmatprep.subr.bf16.mxu0 %v636
    %1110 = vmatpush1.bf16.msra.mxu0 %v635
    %1111 = vmatprep.subr.bf16.mxu0 %v629
    %1112 = vmatpush1.bf16.msra.mxu0 %v628
    %1113 = vmatprep.subr.bf16.mxu0 0
    %1114 = vmatpush2.bf16.msra.mxu0 0
    %1115 = vmatprep.subr.bf16.mxu0 0
    %1116 = vmatpush2.bf16.msra.mxu0 0
    %1117 = vmatprep.subr.bf16.mxu0 0
    %1118 = vmatpush2.bf16.msra.mxu0 0
    %1119 = vmatprep.subr.bf16.mxu0 0
    %1120 = vmatpush2.bf16.msra.mxu0 0
    %1121 = vmatprep.subr.bf16.mxu0 0
    %1122 = vmatpush2.bf16.msra.mxu0 0
    %1123 = vmatprep.subr.bf16.mxu0 0
    %1124 = vmatpush2.bf16.msra.mxu0 0
    %1125 = vmatprep.subr.bf16.mxu0 0
    %1126 = vmatpush2.bf16.msra.mxu0 0
    %1127 = vmatprep.subr.bf16.mxu0 0
    %1128 = vmatpush2.bf16.msra.mxu0 0
    %1129 = vmatprep.mubr.bf16.mxu0 0
    %1130 = vmatmul.mubr.bf16.gmra.mxu0 %v710
    %v1131 = vpop.f32.mrf.mxu0
    %v1132 = vadd.f32 0.5, %v1131
    %v1133 = vpop.f32.mrf.mxu0
    %v1134 = vadd.f32 0.5, %v1133
    %v1135 = vpop.f32.mrf.mxu0
    %v1136 = vadd.f32 0.5, %v1135
    %v1137 = vpop.f32.mrf.mxu0
    %v1138 = vadd.f32 0.5, %v1137
    %1139 = vmatprep.mubr.bf16.mxu0 0
    %1140 = vmatmul.mubr.bf16.gmra.mxu0 %v713
    %v1141 = vpop.f32.mrf.mxu0
    %v1142 = vadd.f32 0.5, %v1141
    %v1143 = vpop.f32.mrf.mxu0
    %v1144 = vadd.f32 0.5, %v1143
    %v1145 = vpop.f32.mrf.mxu0
    %v1146 = vadd.f32 0.5, %v1145
    %v1147 = vpop.f32.mrf.mxu0
    %v1148 = vadd.f32 0.5, %v1147
    %1149 = vmatprep.mubr.bf16.mxu0 0
    %1150 = vmatmul.mubr.bf16.gmra.mxu0 %v716
    %v1151 = vpop.f32.mrf.mxu0
    %v1152 = vadd.f32 0.5, %v1151
    %v1153 = vpop.f32.mrf.mxu0
    %v1154 = vadd.f32 0.5, %v1153
    %v1155 = vpop.f32.mrf.mxu0
    %v1156 = vadd.f32 0.5, %v1155
    %v1157 = vpop.f32.mrf.mxu0
    %v1158 = vadd.f32 0.5, %v1157
    %1159 = vmatprep.mubr.bf16.mxu0 0
    %1160 = vmatmul.mubr.bf16.gmra.mxu0 %v719
    %v1161 = vpop.f32.mrf.mxu0
    %v1162 = vadd.f32 0.5, %v1161
    %v1163 = vpop.f32.mrf.mxu0
    %v1164 = vadd.f32 0.5, %v1163
    %v1165 = vpop.f32.mrf.mxu0
    %v1166 = vadd.f32 0.5, %v1165
    %v1167 = vpop.f32.mrf.mxu0
    %v1168 = vadd.f32 0.5, %v1167
    %1169 = vmatprep.mubr.bf16.mxu0 0
    %1170 = vmatmul.mubr.bf16.gmra.mxu0 %v722
    %v1171 = vpop.f32.mrf.mxu0
    %v1172 = vadd.f32 0.5, %v1171
    %v1173 = vpop.f32.mrf.mxu0
    %v1174 = vadd.f32 0.5, %v1173
    %v1175 = vpop.f32.mrf.mxu0
    %v1176 = vadd.f32 0.5, %v1175
    %v1177 = vpop.f32.mrf.mxu0
    %v1178 = vadd.f32 0.5, %v1177
    %1179 = vmatprep.mubr.bf16.mxu0 0
    %1180 = vmatmul.mubr.bf16.gmra.mxu0 %v725
    %v1181 = vpop.f32.mrf.mxu0
    %v1182 = vadd.f32 0.5, %v1181
    %v1183 = vpop.f32.mrf.mxu0
    %v1184 = vadd.f32 0.5, %v1183
    %v1185 = vpop.f32.mrf.mxu0
    %v1186 = vadd.f32 0.5, %v1185
    %v1187 = vpop.f32.mrf.mxu0
    %v1188 = vadd.f32 0.5, %v1187
    %1189 = vmatprep.mubr.bf16.mxu0 0
    %1190 = vmatmul.mubr.bf16.gmra.mxu0 %v728
    %v1191 = vpop.f32.mrf.mxu0
    %v1192 = vadd.f32 0.5, %v1191
    %v1193 = vpop.f32.mrf.mxu0
    %v1194 = vadd.f32 0.5, %v1193
    %v1195 = vpop.f32.mrf.mxu0
    %v1196 = vadd.f32 0.5, %v1195
    %v1197 = vpop.f32.mrf.mxu0
    %v1198 = vadd.f32 0.5, %v1197
    %1199 = vmatprep.mubr.bf16.mxu0 0
    %1200 = vmatmul.mubr.bf16.gmra.mxu0 %v731
    %v1201 = vpop.f32.mrf.mxu0
    %v1202 = vadd.f32 0.5, %v1201
    %v1203 = vpop.f32.mrf.mxu0
    %v1204 = vadd.f32 0.5, %v1203
    %v1205 = vpop.f32.mrf.mxu0
    %v1206 = vadd.f32 0.5, %v1205
    %v1207 = vpop.f32.mrf.mxu0
    %v1208 = vadd.f32 0.5, %v1207
    %1209 = vmatprep.mubr.bf16.mxu0 0
    %1210 = vmatmul.mubr.bf16.gmra.mxu0 %v734
    %v1211 = vpop.f32.mrf.mxu0
    %v1212 = vadd.f32 0.5, %v1211
    %v1213 = vpop.f32.mrf.mxu0
    %v1214 = vadd.f32 0.5, %v1213
    %v1215 = vpop.f32.mrf.mxu0
    %v1216 = vadd.f32 0.5, %v1215
    %v1217 = vpop.f32.mrf.mxu0
    %v1218 = vadd.f32 0.5, %v1217
    %1219 = vmatprep.mubr.bf16.mxu0 0
    %1220 = vmatmul.mubr.bf16.gmra.mxu0 %v737
    %v1221 = vpop.f32.mrf.mxu0
    %v1222 = vadd.f32 0.5, %v1221
    %v1223 = vpop.f32.mrf.mxu0
    %v1224 = vadd.f32 0.5, %v1223
    %v1225 = vpop.f32.mrf.mxu0
    %v1226 = vadd.f32 0.5, %v1225
    %v1227 = vpop.f32.mrf.mxu0
    %v1228 = vadd.f32 0.5, %v1227
    %1229 = vmatprep.mubr.bf16.mxu0 0
    %1230 = vmatmul.mubr.bf16.gmra.mxu0 %v740
    %v1231 = vpop.f32.mrf.mxu0
    %v1232 = vadd.f32 0.5, %v1231
    %v1233 = vpop.f32.mrf.mxu0
    %v1234 = vadd.f32 0.5, %v1233
    %v1235 = vpop.f32.mrf.mxu0
    %v1236 = vadd.f32 0.5, %v1235
    %v1237 = vpop.f32.mrf.mxu0
    %v1238 = vadd.f32 0.5, %v1237
    %1239 = vmatprep.mubr.bf16.mxu0 0
    %1240 = vmatmul.mubr.bf16.gmra.mxu0 %v743
    %v1241 = vpop.f32.mrf.mxu0
    %v1242 = vadd.f32 0.5, %v1241
    %v1243 = vpop.f32.mrf.mxu0
    %v1244 = vadd.f32 0.5, %v1243
    %v1245 = vpop.f32.mrf.mxu0
    %v1246 = vadd.f32 0.5, %v1245
    %v1247 = vpop.f32.mrf.mxu0
    %v1248 = vadd.f32 0.5, %v1247
    %1249 = vmatprep.mubr.bf16.mxu0 0
    %1250 = vmatmul.mubr.bf16.gmra.mxu0 %v746
    %v1251 = vpop.f32.mrf.mxu0
    %v1252 = vadd.f32 0.5, %v1251
    %v1253 = vpop.f32.mrf.mxu0
    %v1254 = vadd.f32 0.5, %v1253
    %v1255 = vpop.f32.mrf.mxu0
    %v1256 = vadd.f32 0.5, %v1255
    %v1257 = vpop.f32.mrf.mxu0
    %v1258 = vadd.f32 0.5, %v1257
    %1259 = vmatprep.mubr.bf16.mxu0 0
    %1260 = vmatmul.mubr.bf16.gmra.mxu0 %v749
    %v1261 = vpop.f32.mrf.mxu0
    %v1262 = vadd.f32 0.5, %v1261
    %v1263 = vpop.f32.mrf.mxu0
    %v1264 = vadd.f32 0.5, %v1263
    %v1265 = vpop.f32.mrf.mxu0
    %v1266 = vadd.f32 0.5, %v1265
    %v1267 = vpop.f32.mrf.mxu0
    %v1268 = vadd.f32 0.5, %v1267
    %1269 = vdwg.mxu0
    %1270 = vmatprep.subr.bf16.mxu0 0
    %1271 = vmatpush1.bf16.msra.mxu0 0
    %1272 = vmatprep.subr.bf16.mxu0 0
    %1273 = vmatpush1.bf16.msra.mxu0 0
    %1274 = vmatprep.subr.bf16.mxu0 0
    %1275 = vmatpush1.bf16.msra.mxu0 0
    %1276 = vmatprep.subr.bf16.mxu0 0
    %1277 = vmatpush1.bf16.msra.mxu0 0
    %1278 = vmatprep.subr.bf16.mxu0 0
    %1279 = vmatpush1.bf16.msra.mxu0 0
    %1280 = vmatprep.subr.bf16.mxu0 0
    %1281 = vmatpush1.bf16.msra.mxu0 0
    %1282 = vmatprep.subr.bf16.mxu0 0
    %1283 = vmatpush1.bf16.msra.mxu0 %v637
    %1284 = vmatprep.subr.bf16.mxu0 0
    %1285 = vmatpush1.bf16.msra.mxu0 %v630
    %1286 = vmatprep.subr.bf16.mxu0 0
    %1287 = vmatpush2.bf16.msra.mxu0 0
    %1288 = vmatprep.subr.bf16.mxu0 0
    %1289 = vmatpush2.bf16.msra.mxu0 0
    %1290 = vmatprep.subr.bf16.mxu0 0
    %1291 = vmatpush2.bf16.msra.mxu0 0
    %1292 = vmatprep.subr.bf16.mxu0 0
    %1293 = vmatpush2.bf16.msra.mxu0 0
    %1294 = vmatprep.subr.bf16.mxu0 0
    %1295 = vmatpush2.bf16.msra.mxu0 0
    %1296 = vmatprep.subr.bf16.mxu0 0
    %1297 = vmatpush2.bf16.msra.mxu0 0
    %1298 = vmatprep.subr.bf16.mxu0 0
    %1299 = vmatpush2.bf16.msra.mxu0 0
    %1300 = vmatprep.subr.bf16.mxu0 0
    %1301 = vmatpush2.bf16.msra.mxu0 0
    %1302 = vmatprep.mubr.bf16.mxu0 0
    %1303 = vmatmul.mubr.bf16.gmra.mxu0 %v710
    %v1304 = vpop.f32.mrf.mxu0
    %v1305 = vadd.f32 0.5, %v1304
    %v1306 = vpop.f32.mrf.mxu0
    %v1307 = vpop.f32.mrf.mxu0
    %v1308 = vadd.f32 0.5, %v1307
    %v1309 = vpop.f32.mrf.mxu0
    %1310 = vmatprep.mubr.bf16.mxu0 0
    %1311 = vmatmul.mubr.bf16.gmra.mxu0 %v713
    %v1312 = vpop.f32.mrf.mxu0
    %v1313 = vadd.f32 0.5, %v1312
    %v1314 = vpop.f32.mrf.mxu0
    %v1315 = vpop.f32.mrf.mxu0
    %v1316 = vadd.f32 0.5, %v1315
    %v1317 = vpop.f32.mrf.mxu0
    %1318 = vmatprep.mubr.bf16.mxu0 0
    %1319 = vmatmul.mubr.bf16.gmra.mxu0 %v716
    %v1320 = vpop.f32.mrf.mxu0
    %v1321 = vadd.f32 0.5, %v1320
    %v1322 = vpop.f32.mrf.mxu0
    %v1323 = vpop.f32.mrf.mxu0
    %v1324 = vadd.f32 0.5, %v1323
    %v1325 = vpop.f32.mrf.mxu0
    %1326 = vmatprep.mubr.bf16.mxu0 0
    %1327 = vmatmul.mubr.bf16.gmra.mxu0 %v719
    %v1328 = vpop.f32.mrf.mxu0
    %v1329 = vadd.f32 0.5, %v1328
    %v1330 = vpop.f32.mrf.mxu0
    %v1331 = vpop.f32.mrf.mxu0
    %v1332 = vadd.f32 0.5, %v1331
    %v1333 = vpop.f32.mrf.mxu0
    %1334 = vmatprep.mubr.bf16.mxu0 0
    %1335 = vmatmul.mubr.bf16.gmra.mxu0 %v722
    %v1336 = vpop.f32.mrf.mxu0
    %v1337 = vadd.f32 0.5, %v1336
    %v1338 = vpop.f32.mrf.mxu0
    %v1339 = vpop.f32.mrf.mxu0
    %v1340 = vadd.f32 0.5, %v1339
    %v1341 = vpop.f32.mrf.mxu0
    %1342 = vmatprep.mubr.bf16.mxu0 0
    %1343 = vmatmul.mubr.bf16.gmra.mxu0 %v725
    %v1344 = vpop.f32.mrf.mxu0
    %v1345 = vadd.f32 0.5, %v1344
    %v1346 = vpop.f32.mrf.mxu0
    %v1347 = vpop.f32.mrf.mxu0
    %v1348 = vadd.f32 0.5, %v1347
    %v1349 = vpop.f32.mrf.mxu0
    %1350 = vmatprep.mubr.bf16.mxu0 0
    %1351 = vmatmul.mubr.bf16.gmra.mxu0 %v728
    %v1352 = vpop.f32.mrf.mxu0
    %v1353 = vadd.f32 0.5, %v1352
    %v1354 = vpop.f32.mrf.mxu0
    %v1355 = vpop.f32.mrf.mxu0
    %v1356 = vadd.f32 0.5, %v1355
    %v1357 = vpop.f32.mrf.mxu0
    %1358 = vmatprep.mubr.bf16.mxu0 0
    %1359 = vmatmul.mubr.bf16.gmra.mxu0 %v731
    %v1360 = vpop.f32.mrf.mxu0
    %v1361 = vadd.f32 0.5, %v1360
    %v1362 = vpop.f32.mrf.mxu0
    %v1363 = vpop.f32.mrf.mxu0
    %v1364 = vadd.f32 0.5, %v1363
    %v1365 = vpop.f32.mrf.mxu0
    %1366 = vmatprep.mubr.bf16.mxu0 0
    %1367 = vmatmul.mubr.bf16.gmra.mxu0 %v734
    %v1368 = vpop.f32.mrf.mxu0
    %v1369 = vadd.f32 0.5, %v1368
    %v1370 = vpop.f32.mrf.mxu0
    %v1371 = vpop.f32.mrf.mxu0
    %v1372 = vadd.f32 0.5, %v1371
    %v1373 = vpop.f32.mrf.mxu0
    %1374 = vmatprep.mubr.bf16.mxu0 0
    %1375 = vmatmul.mubr.bf16.gmra.mxu0 %v737
    %v1376 = vpop.f32.mrf.mxu0
    %v1377 = vadd.f32 0.5, %v1376
    %v1378 = vpop.f32.mrf.mxu0
    %v1379 = vpop.f32.mrf.mxu0
    %v1380 = vadd.f32 0.5, %v1379
    %v1381 = vpop.f32.mrf.mxu0
    %1382 = vmatprep.mubr.bf16.mxu0 0
    %1383 = vmatmul.mubr.bf16.gmra.mxu0 %v740
    %v1384 = vpop.f32.mrf.mxu0
    %v1385 = vadd.f32 0.5, %v1384
    %v1386 = vpop.f32.mrf.mxu0
    %v1387 = vpop.f32.mrf.mxu0
    %v1388 = vadd.f32 0.5, %v1387
    %v1389 = vpop.f32.mrf.mxu0
    %1390 = vmatprep.mubr.bf16.mxu0 0
    %1391 = vmatmul.mubr.bf16.gmra.mxu0 %v743
    %v1392 = vpop.f32.mrf.mxu0
    %v1393 = vadd.f32 0.5, %v1392
    %v1394 = vpop.f32.mrf.mxu0
    %v1395 = vpop.f32.mrf.mxu0
    %v1396 = vadd.f32 0.5, %v1395
    %v1397 = vpop.f32.mrf.mxu0
    %1398 = vmatprep.mubr.bf16.mxu0 0
    %1399 = vmatmul.mubr.bf16.gmra.mxu0 %v746
    %v1400 = vpop.f32.mrf.mxu0
    %v1401 = vadd.f32 0.5, %v1400
    %v1402 = vpop.f32.mrf.mxu0
    %v1403 = vpop.f32.mrf.mxu0
    %v1404 = vadd.f32 0.5, %v1403
    %v1405 = vpop.f32.mrf.mxu0
    %1406 = vmatprep.mubr.bf16.mxu0 0
    %1407 = vmatmul.mubr.bf16.gmra.mxu0 %v749
    %v1408 = vpop.f32.mrf.mxu0
    %v1409 = vadd.f32 0.5, %v1408
    %v1410 = vpop.f32.mrf.mxu0
    %v1411 = vpop.f32.mrf.mxu0
    %v1412 = vadd.f32 0.5, %v1411
    %v1413 = vpop.f32.mrf.mxu0
    %1414 = vdwg.mxu0
    %v1415 = vfloor.f32 %v786
    %v1416 = vfloor.f32 %v788
    %v1417 = vfloor.f32 %v959
    %v1418 = vfloor.f32 %v961
    %v1419 = vfloor.f32 %v1132
    %v1420 = vfloor.f32 %v1134
    %v1421 = vfloor.f32 %v1305
    %v1422 = vfloor.f32 %v790
    %v1423 = vfloor.f32 %v792
    %v1424 = vfloor.f32 %v963
    %v1425 = vfloor.f32 %v965
    %v1426 = vfloor.f32 %v1136
    %v1427 = vfloor.f32 %v1138
    %v1428 = vfloor.f32 %v1308
    %v1429 = vfloor.f32 %v796
    %v1430 = vfloor.f32 %v798
    %v1431 = vfloor.f32 %v969
    %v1432 = vfloor.f32 %v971
    %v1433 = vfloor.f32 %v1142
    %v1434 = vfloor.f32 %v1144
    %v1435 = vfloor.f32 %v1313
    %v1436 = vfloor.f32 %v800
    %v1437 = vfloor.f32 %v802
    %v1438 = vfloor.f32 %v973
    %v1439 = vfloor.f32 %v975
    %v1440 = vfloor.f32 %v1146
    %v1441 = vfloor.f32 %v1148
    %v1442 = vfloor.f32 %v1316
    %v1443 = vfloor.f32 %v806
    %v1444 = vfloor.f32 %v808
    %v1445 = vfloor.f32 %v979
    %v1446 = vfloor.f32 %v981
    %v1447 = vfloor.f32 %v1152
    %v1448 = vfloor.f32 %v1154
    %v1449 = vfloor.f32 %v1321
    %v1450 = vfloor.f32 %v810
    %v1451 = vfloor.f32 %v812
    %v1452 = vfloor.f32 %v983
    %v1453 = vfloor.f32 %v985
    %v1454 = vfloor.f32 %v1156
    %v1455 = vfloor.f32 %v1158
    %v1456 = vfloor.f32 %v1324
    %v1457 = vfloor.f32 %v816
    %v1458 = vfloor.f32 %v818
    %v1459 = vfloor.f32 %v989
    %v1460 = vfloor.f32 %v991
    %v1461 = vfloor.f32 %v1162
    %v1462 = vfloor.f32 %v1164
    %v1463 = vfloor.f32 %v1329
    %v1464 = vfloor.f32 %v820
    %v1465 = vfloor.f32 %v822
    %v1466 = vfloor.f32 %v993
    %v1467 = vfloor.f32 %v995
    %v1468 = vfloor.f32 %v1166
    %v1469 = vfloor.f32 %v1168
    %v1470 = vfloor.f32 %v1332
    %v1471 = vfloor.f32 %v826
    %v1472 = vfloor.f32 %v828
    %v1473 = vfloor.f32 %v999
    %v1474 = vfloor.f32 %v1001
    %v1475 = vfloor.f32 %v1172
    %v1476 = vfloor.f32 %v1174
    %v1477 = vfloor.f32 %v1337
    %v1478 = vfloor.f32 %v830
    %v1479 = vfloor.f32 %v832
    %v1480 = vfloor.f32 %v1003
    %v1481 = vfloor.f32 %v1005
    %v1482 = vfloor.f32 %v1176
    %v1483 = vfloor.f32 %v1178
    %v1484 = vfloor.f32 %v1340
    %v1485 = vfloor.f32 %v836
    %v1486 = vfloor.f32 %v838
    %v1487 = vfloor.f32 %v1009
    %v1488 = vfloor.f32 %v1011
    %v1489 = vfloor.f32 %v1182
    %v1490 = vfloor.f32 %v1184
    %v1491 = vfloor.f32 %v1345
    %v1492 = vfloor.f32 %v840
    %v1493 = vfloor.f32 %v842
    %v1494 = vfloor.f32 %v1013
    %v1495 = vfloor.f32 %v1015
    %v1496 = vfloor.f32 %v1186
    %v1497 = vfloor.f32 %v1188
    %v1498 = vfloor.f32 %v1348
    %v1499 = vfloor.f32 %v846
    %v1500 = vfloor.f32 %v848
    %v1501 = vfloor.f32 %v1019
    %v1502 = vfloor.f32 %v1021
    %v1503 = vfloor.f32 %v1192
    %v1504 = vfloor.f32 %v1194
    %v1505 = vfloor.f32 %v1353
    %v1506 = vfloor.f32 %v850
    %v1507 = vfloor.f32 %v852
    %v1508 = vfloor.f32 %v1023
    %v1509 = vfloor.f32 %v1025
    %v1510 = vfloor.f32 %v1196
    %v1511 = vfloor.f32 %v1198
    %v1512 = vfloor.f32 %v1356
    %v1513 = vfloor.f32 %v856
    %v1514 = vfloor.f32 %v858
    %v1515 = vfloor.f32 %v1029
    %v1516 = vfloor.f32 %v1031
    %v1517 = vfloor.f32 %v1202
    %v1518 = vfloor.f32 %v1204
    %v1519 = vfloor.f32 %v1361
    %v1520 = vfloor.f32 %v860
    %v1521 = vfloor.f32 %v862
    %v1522 = vfloor.f32 %v1033
    %v1523 = vfloor.f32 %v1035
    %v1524 = vfloor.f32 %v1206
    %v1525 = vfloor.f32 %v1208
    %v1526 = vfloor.f32 %v1364
    %v1527 = vfloor.f32 %v866
    %v1528 = vfloor.f32 %v868
    %v1529 = vfloor.f32 %v1039
    %v1530 = vfloor.f32 %v1041
    %v1531 = vfloor.f32 %v1212
    %v1532 = vfloor.f32 %v1214
    %v1533 = vfloor.f32 %v1369
    %v1534 = vfloor.f32 %v870
    %v1535 = vfloor.f32 %v872
    %v1536 = vfloor.f32 %v1043
    %v1537 = vfloor.f32 %v1045
    %v1538 = vfloor.f32 %v1216
    %v1539 = vfloor.f32 %v1218
    %v1540 = vfloor.f32 %v1372
    %v1541 = vfloor.f32 %v876
    %v1542 = vfloor.f32 %v878
    %v1543 = vfloor.f32 %v1049
    %v1544 = vfloor.f32 %v1051
    %v1545 = vfloor.f32 %v1222
    %v1546 = vfloor.f32 %v1224
    %v1547 = vfloor.f32 %v1377
    %v1548 = vfloor.f32 %v880
    %v1549 = vfloor.f32 %v882
    %v1550 = vfloor.f32 %v1053
    %v1551 = vfloor.f32 %v1055
    %v1552 = vfloor.f32 %v1226
    %v1553 = vfloor.f32 %v1228
    %v1554 = vfloor.f32 %v1380
    %v1555 = vfloor.f32 %v886
    %v1556 = vfloor.f32 %v888
    %v1557 = vfloor.f32 %v1059
    %v1558 = vfloor.f32 %v1061
    %v1559 = vfloor.f32 %v1232
    %v1560 = vfloor.f32 %v1234
    %v1561 = vfloor.f32 %v1385
    %v1562 = vfloor.f32 %v890
    %v1563 = vfloor.f32 %v892
    %v1564 = vfloor.f32 %v1063
    %v1565 = vfloor.f32 %v1065
    %v1566 = vfloor.f32 %v1236
    %v1567 = vfloor.f32 %v1238
    %v1568 = vfloor.f32 %v1388
    %v1569 = vfloor.f32 %v896
    %v1570 = vfloor.f32 %v898
    %v1571 = vfloor.f32 %v1069
    %v1572 = vfloor.f32 %v1071
    %v1573 = vfloor.f32 %v1242
    %v1574 = vfloor.f32 %v1244
    %v1575 = vfloor.f32 %v1393
    %v1576 = vfloor.f32 %v900
    %v1577 = vfloor.f32 %v902
    %v1578 = vfloor.f32 %v1073
    %v1579 = vfloor.f32 %v1075
    %v1580 = vfloor.f32 %v1246
    %v1581 = vfloor.f32 %v1248
    %v1582 = vfloor.f32 %v1396
    %v1583 = vfloor.f32 %v906
    %v1584 = vfloor.f32 %v908
    %v1585 = vfloor.f32 %v1079
    %v1586 = vfloor.f32 %v1081
    %v1587 = vfloor.f32 %v1252
    %v1588 = vfloor.f32 %v1254
    %v1589 = vfloor.f32 %v1401
    %v1590 = vfloor.f32 %v910
    %v1591 = vfloor.f32 %v912
    %v1592 = vfloor.f32 %v1083
    %v1593 = vfloor.f32 %v1085
    %v1594 = vfloor.f32 %v1256
    %v1595 = vfloor.f32 %v1258
    %v1596 = vfloor.f32 %v1404
    %v1597 = vfloor.f32 %v916
    %v1598 = vfloor.f32 %v918
    %v1599 = vfloor.f32 %v1089
    %v1600 = vfloor.f32 %v1091
    %v1601 = vfloor.f32 %v1262
    %v1602 = vfloor.f32 %v1264
    %v1603 = vfloor.f32 %v1409
    %v1604 = vfloor.f32 %v920
    %v1605 = vfloor.f32 %v922
    %v1606 = vfloor.f32 %v1093
    %v1607 = vfloor.f32 %v1095
    %v1608 = vfloor.f32 %v1266
    %v1609 = vfloor.f32 %v1268
    %v1610 = vfloor.f32 %v1412
    %v1611 = vmax.f32 %v1415, 0.0
    %v1612 = vmax.f32 %v1416, 0.0
    %v1613 = vmax.f32 %v1417, 0.0
    %v1614 = vmax.f32 %v1418, 0.0
    %v1615 = vmax.f32 %v1419, 0.0
    %v1616 = vmax.f32 %v1420, 0.0
    %v1617 = vmax.f32 %v1421, 0.0
    %v1618 = vmax.f32 %v1422, 0.0
    %v1619 = vmax.f32 %v1423, 0.0
    %v1620 = vmax.f32 %v1424, 0.0
    %v1621 = vmax.f32 %v1425, 0.0
    %v1622 = vmax.f32 %v1426, 0.0
    %v1623 = vmax.f32 %v1427, 0.0
    %v1624 = vmax.f32 %v1428, 0.0
    %v1625 = vmax.f32 %v1429, 0.0
    %v1626 = vmax.f32 %v1430, 0.0
    %v1627 = vmax.f32 %v1431, 0.0
    %v1628 = vmax.f32 %v1432, 0.0
    %v1629 = vmax.f32 %v1433, 0.0
    %v1630 = vmax.f32 %v1434, 0.0
    %v1631 = vmax.f32 %v1435, 0.0
    %v1632 = vmax.f32 %v1436, 0.0
    %v1633 = vmax.f32 %v1437, 0.0
    %v1634 = vmax.f32 %v1438, 0.0
    %v1635 = vmax.f32 %v1439, 0.0
    %v1636 = vmax.f32 %v1440, 0.0
    %v1637 = vmax.f32 %v1441, 0.0
    %v1638 = vmax.f32 %v1442, 0.0
    %v1639 = vmax.f32 %v1443, 0.0
    %v1640 = vmax.f32 %v1444, 0.0
    %v1641 = vmax.f32 %v1445, 0.0
    %v1642 = vmax.f32 %v1446, 0.0
    %v1643 = vmax.f32 %v1447, 0.0
    %v1644 = vmax.f32 %v1448, 0.0
    %v1645 = vmax.f32 %v1449, 0.0
    %v1646 = vmax.f32 %v1450, 0.0
    %v1647 = vmax.f32 %v1451, 0.0
    %v1648 = vmax.f32 %v1452, 0.0
    %v1649 = vmax.f32 %v1453, 0.0
    %v1650 = vmax.f32 %v1454, 0.0
    %v1651 = vmax.f32 %v1455, 0.0
    %v1652 = vmax.f32 %v1456, 0.0
    %v1653 = vmax.f32 %v1457, 0.0
    %v1654 = vmax.f32 %v1458, 0.0
    %v1655 = vmax.f32 %v1459, 0.0
    %v1656 = vmax.f32 %v1460, 0.0
    %v1657 = vmax.f32 %v1461, 0.0
    %v1658 = vmax.f32 %v1462, 0.0
    %v1659 = vmax.f32 %v1463, 0.0
    %v1660 = vmax.f32 %v1464, 0.0
    %v1661 = vmax.f32 %v1465, 0.0
    %v1662 = vmax.f32 %v1466, 0.0
    %v1663 = vmax.f32 %v1467, 0.0
    %v1664 = vmax.f32 %v1468, 0.0
    %v1665 = vmax.f32 %v1469, 0.0
    %v1666 = vmax.f32 %v1470, 0.0
    %v1667 = vmax.f32 %v1471, 0.0
    %v1668 = vmax.f32 %v1472, 0.0
    %v1669 = vmax.f32 %v1473, 0.0
    %v1670 = vmax.f32 %v1474, 0.0
    %v1671 = vmax.f32 %v1475, 0.0
    %v1672 = vmax.f32 %v1476, 0.0
    %v1673 = vmax.f32 %v1477, 0.0
    %v1674 = vmax.f32 %v1478, 0.0
    %v1675 = vmax.f32 %v1479, 0.0
    %v1676 = vmax.f32 %v1480, 0.0
    %v1677 = vmax.f32 %v1481, 0.0
    %v1678 = vmax.f32 %v1482, 0.0
    %v1679 = vmax.f32 %v1483, 0.0
    %v1680 = vmax.f32 %v1484, 0.0
    %v1681 = vmax.f32 %v1485, 0.0
    %v1682 = vmax.f32 %v1486, 0.0
    %v1683 = vmax.f32 %v1487, 0.0
    %v1684 = vmax.f32 %v1488, 0.0
    %v1685 = vmax.f32 %v1489, 0.0
    %v1686 = vmax.f32 %v1490, 0.0
    %v1687 = vmax.f32 %v1491, 0.0
    %v1688 = vmax.f32 %v1492, 0.0
    %v1689 = vmax.f32 %v1493, 0.0
    %v1690 = vmax.f32 %v1494, 0.0
    %v1691 = vmax.f32 %v1495, 0.0
    %v1692 = vmax.f32 %v1496, 0.0
    %v1693 = vmax.f32 %v1497, 0.0
    %v1694 = vmax.f32 %v1498, 0.0
    %v1695 = vmax.f32 %v1499, 0.0
    %v1696 = vmax.f32 %v1500, 0.0
    %v1697 = vmax.f32 %v1501, 0.0
    %v1698 = vmax.f32 %v1502, 0.0
    %v1699 = vmax.f32 %v1503, 0.0
    %v1700 = vmax.f32 %v1504, 0.0
    %v1701 = vmax.f32 %v1505, 0.0
    %v1702 = vmax.f32 %v1506, 0.0
    %v1703 = vmax.f32 %v1507, 0.0
    %v1704 = vmax.f32 %v1508, 0.0
    %v1705 = vmax.f32 %v1509, 0.0
    %v1706 = vmax.f32 %v1510, 0.0
    %v1707 = vmax.f32 %v1511, 0.0
    %v1708 = vmax.f32 %v1512, 0.0
    %v1709 = vmax.f32 %v1513, 0.0
    %v1710 = vmax.f32 %v1514, 0.0
    %v1711 = vmax.f32 %v1515, 0.0
    %v1712 = vmax.f32 %v1516, 0.0
    %v1713 = vmax.f32 %v1517, 0.0
    %v1714 = vmax.f32 %v1518, 0.0
    %v1715 = vmax.f32 %v1519, 0.0
    %v1716 = vmax.f32 %v1520, 0.0
    %v1717 = vmax.f32 %v1521, 0.0
    %v1718 = vmax.f32 %v1522, 0.0
    %v1719 = vmax.f32 %v1523, 0.0
    %v1720 = vmax.f32 %v1524, 0.0
    %v1721 = vmax.f32 %v1525, 0.0
    %v1722 = vmax.f32 %v1526, 0.0
    %v1723 = vmax.f32 %v1527, 0.0
    %v1724 = vmax.f32 %v1528, 0.0
    %v1725 = vmax.f32 %v1529, 0.0
    %v1726 = vmax.f32 %v1530, 0.0
    %v1727 = vmax.f32 %v1531, 0.0
    %v1728 = vmax.f32 %v1532, 0.0
    %v1729 = vmax.f32 %v1533, 0.0
    %v1730 = vmax.f32 %v1534, 0.0
    %v1731 = vmax.f32 %v1535, 0.0
    %v1732 = vmax.f32 %v1536, 0.0
    %v1733 = vmax.f32 %v1537, 0.0
    %v1734 = vmax.f32 %v1538, 0.0
    %v1735 = vmax.f32 %v1539, 0.0
    %v1736 = vmax.f32 %v1540, 0.0
    %v1737 = vmax.f32 %v1541, 0.0
    %v1738 = vmax.f32 %v1542, 0.0
    %v1739 = vmax.f32 %v1543, 0.0
    %v1740 = vmax.f32 %v1544, 0.0
    %v1741 = vmax.f32 %v1545, 0.0
    %v1742 = vmax.f32 %v1546, 0.0
    %v1743 = vmax.f32 %v1547, 0.0
    %v1744 = vmax.f32 %v1548, 0.0
    %v1745 = vmax.f32 %v1549, 0.0
    %v1746 = vmax.f32 %v1550, 0.0
    %v1747 = vmax.f32 %v1551, 0.0
    %v1748 = vmax.f32 %v1552, 0.0
    %v1749 = vmax.f32 %v1553, 0.0
    %v1750 = vmax.f32 %v1554, 0.0
    %v1751 = vmax.f32 %v1555, 0.0
    %v1752 = vmax.f32 %v1556, 0.0
    %v1753 = vmax.f32 %v1557, 0.0
    %v1754 = vmax.f32 %v1558, 0.0
    %v1755 = vmax.f32 %v1559, 0.0
    %v1756 = vmax.f32 %v1560, 0.0
    %v1757 = vmax.f32 %v1561, 0.0
    %v1758 = vmax.f32 %v1562, 0.0
    %v1759 = vmax.f32 %v1563, 0.0
    %v1760 = vmax.f32 %v1564, 0.0
    %v1761 = vmax.f32 %v1565, 0.0
    %v1762 = vmax.f32 %v1566, 0.0
    %v1763 = vmax.f32 %v1567, 0.0
    %v1764 = vmax.f32 %v1568, 0.0
    %v1765 = vmax.f32 %v1569, 0.0
    %v1766 = vmax.f32 %v1570, 0.0
    %v1767 = vmax.f32 %v1571, 0.0
    %v1768 = vmax.f32 %v1572, 0.0
    %v1769 = vmax.f32 %v1573, 0.0
    %v1770 = vmax.f32 %v1574, 0.0
    %v1771 = vmax.f32 %v1575, 0.0
    %v1772 = vmax.f32 %v1576, 0.0
    %v1773 = vmax.f32 %v1577, 0.0
    %v1774 = vmax.f32 %v1578, 0.0
    %v1775 = vmax.f32 %v1579, 0.0
    %v1776 = vmax.f32 %v1580, 0.0
    %v1777 = vmax.f32 %v1581, 0.0
    %v1778 = vmax.f32 %v1582, 0.0
    %v1779 = vmax.f32 %v1583, 0.0
    %v1780 = vmax.f32 %v1584, 0.0
    %v1781 = vmax.f32 %v1585, 0.0
    %v1782 = vmax.f32 %v1586, 0.0
    %v1783 = vmax.f32 %v1587, 0.0
    %v1784 = vmax.f32 %v1588, 0.0
    %v1785 = vmax.f32 %v1589, 0.0
    %v1786 = vmax.f32 %v1590, 0.0
    %v1787 = vmax.f32 %v1591, 0.0
    %v1788 = vmax.f32 %v1592, 0.0
    %v1789 = vmax.f32 %v1593, 0.0
    %v1790 = vmax.f32 %v1594, 0.0
    %v1791 = vmax.f32 %v1595, 0.0
    %v1792 = vmax.f32 %v1596, 0.0
    %v1793 = vmax.f32 %v1597, 0.0
    %v1794 = vmax.f32 %v1598, 0.0
    %v1795 = vmax.f32 %v1599, 0.0
    %v1796 = vmax.f32 %v1600, 0.0
    %v1797 = vmax.f32 %v1601, 0.0
    %v1798 = vmax.f32 %v1602, 0.0
    %v1799 = vmax.f32 %v1603, 0.0
    %v1800 = vmax.f32 %v1604, 0.0
    %v1801 = vmax.f32 %v1605, 0.0
    %v1802 = vmax.f32 %v1606, 0.0
    %v1803 = vmax.f32 %v1607, 0.0
    %v1804 = vmax.f32 %v1608, 0.0
    %v1805 = vmax.f32 %v1609, 0.0
    %v1806 = vmax.f32 %v1610, 0.0
    %v1807 = vmin.f32 %v1611, 255.0
    %v1808 = vmin.f32 %v1612, 255.0
    %v1809 = vmin.f32 %v1613, 255.0
    %v1810 = vmin.f32 %v1614, 255.0
    %v1811 = vmin.f32 %v1615, 255.0
    %v1812 = vmin.f32 %v1616, 255.0
    %v1813 = vmin.f32 %v1617, 255.0
    %v1814 = vmin.f32 %v1618, 255.0
    %v1815 = vmin.f32 %v1619, 255.0
    %v1816 = vmin.f32 %v1620, 255.0
    %v1817 = vmin.f32 %v1621, 255.0
    %v1818 = vmin.f32 %v1622, 255.0
    %v1819 = vmin.f32 %v1623, 255.0
    %v1820 = vmin.f32 %v1624, 255.0
    %v1821 = vmin.f32 %v1625, 255.0
    %v1822 = vmin.f32 %v1626, 255.0
    %v1823 = vmin.f32 %v1627, 255.0
    %v1824 = vmin.f32 %v1628, 255.0
    %v1825 = vmin.f32 %v1629, 255.0
    %v1826 = vmin.f32 %v1630, 255.0
    %v1827 = vmin.f32 %v1631, 255.0
    %v1828 = vmin.f32 %v1632, 255.0
    %v1829 = vmin.f32 %v1633, 255.0
    %v1830 = vmin.f32 %v1634, 255.0
    %v1831 = vmin.f32 %v1635, 255.0
    %v1832 = vmin.f32 %v1636, 255.0
    %v1833 = vmin.f32 %v1637, 255.0
    %v1834 = vmin.f32 %v1638, 255.0
    %v1835 = vmin.f32 %v1639, 255.0
    %v1836 = vmin.f32 %v1640, 255.0
    %v1837 = vmin.f32 %v1641, 255.0
    %v1838 = vmin.f32 %v1642, 255.0
    %v1839 = vmin.f32 %v1643, 255.0
    %v1840 = vmin.f32 %v1644, 255.0
    %v1841 = vmin.f32 %v1645, 255.0
    %v1842 = vmin.f32 %v1646, 255.0
    %v1843 = vmin.f32 %v1647, 255.0
    %v1844 = vmin.f32 %v1648, 255.0
    %v1845 = vmin.f32 %v1649, 255.0
    %v1846 = vmin.f32 %v1650, 255.0
    %v1847 = vmin.f32 %v1651, 255.0
    %v1848 = vmin.f32 %v1652, 255.0
    %v1849 = vmin.f32 %v1653, 255.0
    %v1850 = vmin.f32 %v1654, 255.0
    %v1851 = vmin.f32 %v1655, 255.0
    %v1852 = vmin.f32 %v1656, 255.0
    %v1853 = vmin.f32 %v1657, 255.0
    %v1854 = vmin.f32 %v1658, 255.0
    %v1855 = vmin.f32 %v1659, 255.0
    %v1856 = vmin.f32 %v1660, 255.0
    %v1857 = vmin.f32 %v1661, 255.0
    %v1858 = vmin.f32 %v1662, 255.0
    %v1859 = vmin.f32 %v1663, 255.0
    %v1860 = vmin.f32 %v1664, 255.0
    %v1861 = vmin.f32 %v1665, 255.0
    %v1862 = vmin.f32 %v1666, 255.0
    %v1863 = vmin.f32 %v1667, 255.0
    %v1864 = vmin.f32 %v1668, 255.0
    %v1865 = vmin.f32 %v1669, 255.0
    %v1866 = vmin.f32 %v1670, 255.0
    %v1867 = vmin.f32 %v1671, 255.0
    %v1868 = vmin.f32 %v1672, 255.0
    %v1869 = vmin.f32 %v1673, 255.0
    %v1870 = vmin.f32 %v1674, 255.0
    %v1871 = vmin.f32 %v1675, 255.0
    %v1872 = vmin.f32 %v1676, 255.0
    %v1873 = vmin.f32 %v1677, 255.0
    %v1874 = vmin.f32 %v1678, 255.0
    %v1875 = vmin.f32 %v1679, 255.0
    %v1876 = vmin.f32 %v1680, 255.0
    %v1877 = vmin.f32 %v1681, 255.0
    %v1878 = vmin.f32 %v1682, 255.0
    %v1879 = vmin.f32 %v1683, 255.0
    %v1880 = vmin.f32 %v1684, 255.0
    %v1881 = vmin.f32 %v1685, 255.0
    %v1882 = vmin.f32 %v1686, 255.0
    %v1883 = vmin.f32 %v1687, 255.0
    %v1884 = vmin.f32 %v1688, 255.0
    %v1885 = vmin.f32 %v1689, 255.0
    %v1886 = vmin.f32 %v1690, 255.0
    %v1887 = vmin.f32 %v1691, 255.0
    %v1888 = vmin.f32 %v1692, 255.0
    %v1889 = vmin.f32 %v1693, 255.0
    %v1890 = vmin.f32 %v1694, 255.0
    %v1891 = vmin.f32 %v1695, 255.0
    %v1892 = vmin.f32 %v1696, 255.0
    %v1893 = vmin.f32 %v1697, 255.0
    %v1894 = vmin.f32 %v1698, 255.0
    %v1895 = vmin.f32 %v1699, 255.0
    %v1896 = vmin.f32 %v1700, 255.0
    %v1897 = vmin.f32 %v1701, 255.0
    %v1898 = vmin.f32 %v1702, 255.0
    %v1899 = vmin.f32 %v1703, 255.0
    %v1900 = vmin.f32 %v1704, 255.0
    %v1901 = vmin.f32 %v1705, 255.0
    %v1902 = vmin.f32 %v1706, 255.0
    %v1903 = vmin.f32 %v1707, 255.0
    %v1904 = vmin.f32 %v1708, 255.0
    %v1905 = vmin.f32 %v1709, 255.0
    %v1906 = vmin.f32 %v1710, 255.0
    %v1907 = vmin.f32 %v1711, 255.0
    %v1908 = vmin.f32 %v1712, 255.0
    %v1909 = vmin.f32 %v1713, 255.0
    %v1910 = vmin.f32 %v1714, 255.0
    %v1911 = vmin.f32 %v1715, 255.0
    %v1912 = vmin.f32 %v1716, 255.0
    %v1913 = vmin.f32 %v1717, 255.0
    %v1914 = vmin.f32 %v1718, 255.0
    %v1915 = vmin.f32 %v1719, 255.0
    %v1916 = vmin.f32 %v1720, 255.0
    %v1917 = vmin.f32 %v1721, 255.0
    %v1918 = vmin.f32 %v1722, 255.0
    %v1919 = vmin.f32 %v1723, 255.0
    %v1920 = vmin.f32 %v1724, 255.0
    %v1921 = vmin.f32 %v1725, 255.0
    %v1922 = vmin.f32 %v1726, 255.0
    %v1923 = vmin.f32 %v1727, 255.0
    %v1924 = vmin.f32 %v1728, 255.0
    %v1925 = vmin.f32 %v1729, 255.0
    %v1926 = vmin.f32 %v1730, 255.0
    %v1927 = vmin.f32 %v1731, 255.0
    %v1928 = vmin.f32 %v1732, 255.0
    %v1929 = vmin.f32 %v1733, 255.0
    %v1930 = vmin.f32 %v1734, 255.0
    %v1931 = vmin.f32 %v1735, 255.0
    %v1932 = vmin.f32 %v1736, 255.0
    %v1933 = vmin.f32 %v1737, 255.0
    %v1934 = vmin.f32 %v1738, 255.0
    %v1935 = vmin.f32 %v1739, 255.0
    %v1936 = vmin.f32 %v1740, 255.0
    %v1937 = vmin.f32 %v1741, 255.0
    %v1938 = vmin.f32 %v1742, 255.0
    %v1939 = vmin.f32 %v1743, 255.0
    %v1940 = vmin.f32 %v1744, 255.0
    %v1941 = vmin.f32 %v1745, 255.0
    %v1942 = vmin.f32 %v1746, 255.0
    %v1943 = vmin.f32 %v1747, 255.0
    %v1944 = vmin.f32 %v1748, 255.0
    %v1945 = vmin.f32 %v1749, 255.0
    %v1946 = vmin.f32 %v1750, 255.0
    %v1947 = vmin.f32 %v1751, 255.0
    %v1948 = vmin.f32 %v1752, 255.0
    %v1949 = vmin.f32 %v1753, 255.0
    %v1950 = vmin.f32 %v1754, 255.0
    %v1951 = vmin.f32 %v1755, 255.0
    %v1952 = vmin.f32 %v1756, 255.0
    %v1953 = vmin.f32 %v1757, 255.0
    %v1954 = vmin.f32 %v1758, 255.0
    %v1955 = vmin.f32 %v1759, 255.0
    %v1956 = vmin.f32 %v1760, 255.0
    %v1957 = vmin.f32 %v1761, 255.0
    %v1958 = vmin.f32 %v1762, 255.0
    %v1959 = vmin.f32 %v1763, 255.0
    %v1960 = vmin.f32 %v1764, 255.0
    %v1961 = vmin.f32 %v1765, 255.0
    %v1962 = vmin.f32 %v1766, 255.0
    %v1963 = vmin.f32 %v1767, 255.0
    %v1964 = vmin.f32 %v1768, 255.0
    %v1965 = vmin.f32 %v1769, 255.0
    %v1966 = vmin.f32 %v1770, 255.0
    %v1967 = vmin.f32 %v1771, 255.0
    %v1968 = vmin.f32 %v1772, 255.0
    %v1969 = vmin.f32 %v1773, 255.0
    %v1970 = vmin.f32 %v1774, 255.0
    %v1971 = vmin.f32 %v1775, 255.0
    %v1972 = vmin.f32 %v1776, 255.0
    %v1973 = vmin.f32 %v1777, 255.0
    %v1974 = vmin.f32 %v1778, 255.0
    %v1975 = vmin.f32 %v1779, 255.0
    %v1976 = vmin.f32 %v1780, 255.0
    %v1977 = vmin.f32 %v1781, 255.0
    %v1978 = vmin.f32 %v1782, 255.0
    %v1979 = vmin.f32 %v1783, 255.0
    %v1980 = vmin.f32 %v1784, 255.0
    %v1981 = vmin.f32 %v1785, 255.0
    %v1982 = vmin.f32 %v1786, 255.0
    %v1983 = vmin.f32 %v1787, 255.0
    %v1984 = vmin.f32 %v1788, 255.0
    %v1985 = vmin.f32 %v1789, 255.0
    %v1986 = vmin.f32 %v1790, 255.0
    %v1987 = vmin.f32 %v1791, 255.0
    %v1988 = vmin.f32 %v1792, 255.0
    %v1989 = vmin.f32 %v1793, 255.0
    %v1990 = vmin.f32 %v1794, 255.0
    %v1991 = vmin.f32 %v1795, 255.0
    %v1992 = vmin.f32 %v1796, 255.0
    %v1993 = vmin.f32 %v1797, 255.0
    %v1994 = vmin.f32 %v1798, 255.0
    %v1995 = vmin.f32 %v1799, 255.0
    %v1996 = vmin.f32 %v1800, 255.0
    %v1997 = vmin.f32 %v1801, 255.0
    %v1998 = vmin.f32 %v1802, 255.0
    %v1999 = vmin.f32 %v1803, 255.0
    %v2000 = vmin.f32 %v1804, 255.0
    %v2001 = vmin.f32 %v1805, 255.0
    %v2002 = vmin.f32 %v1806, 255.0
    %v2003 = vcvt.f32.s32.to.zero.pseudo %v1807
    %v2004 = vcvt.f32.s32.to.zero.pseudo %v1808
    %v2005 = vcvt.f32.s32.to.zero.pseudo %v1809
    %v2006 = vcvt.f32.s32.to.zero.pseudo %v1810
    %v2007 = vcvt.f32.s32.to.zero.pseudo %v1811
    %v2008 = vcvt.f32.s32.to.zero.pseudo %v1812
    %v2009 = vcvt.f32.s32.to.zero.pseudo %v1813
    %v2010 = vcvt.f32.s32.to.zero.pseudo %v1814
    %v2011 = vcvt.f32.s32.to.zero.pseudo %v1815
    %v2012 = vcvt.f32.s32.to.zero.pseudo %v1816
    %v2013 = vcvt.f32.s32.to.zero.pseudo %v1817
    %v2014 = vcvt.f32.s32.to.zero.pseudo %v1818
    %v2015 = vcvt.f32.s32.to.zero.pseudo %v1819
    %v2016 = vcvt.f32.s32.to.zero.pseudo %v1820
    %v2017 = vcvt.f32.s32.to.zero.pseudo %v1821
    %v2018 = vcvt.f32.s32.to.zero.pseudo %v1822
    %v2019 = vcvt.f32.s32.to.zero.pseudo %v1823
    %v2020 = vcvt.f32.s32.to.zero.pseudo %v1824
    %v2021 = vcvt.f32.s32.to.zero.pseudo %v1825
    %v2022 = vcvt.f32.s32.to.zero.pseudo %v1826
    %v2023 = vcvt.f32.s32.to.zero.pseudo %v1827
    %v2024 = vcvt.f32.s32.to.zero.pseudo %v1828
    %v2025 = vcvt.f32.s32.to.zero.pseudo %v1829
    %v2026 = vcvt.f32.s32.to.zero.pseudo %v1830
    %v2027 = vcvt.f32.s32.to.zero.pseudo %v1831
    %v2028 = vcvt.f32.s32.to.zero.pseudo %v1832
    %v2029 = vcvt.f32.s32.to.zero.pseudo %v1833
    %v2030 = vcvt.f32.s32.to.zero.pseudo %v1834
    %v2031 = vcvt.f32.s32.to.zero.pseudo %v1835
    %v2032 = vcvt.f32.s32.to.zero.pseudo %v1836
    %v2033 = vcvt.f32.s32.to.zero.pseudo %v1837
    %v2034 = vcvt.f32.s32.to.zero.pseudo %v1838
    %v2035 = vcvt.f32.s32.to.zero.pseudo %v1839
    %v2036 = vcvt.f32.s32.to.zero.pseudo %v1840
    %v2037 = vcvt.f32.s32.to.zero.pseudo %v1841
    %v2038 = vcvt.f32.s32.to.zero.pseudo %v1842
    %v2039 = vcvt.f32.s32.to.zero.pseudo %v1843
    %v2040 = vcvt.f32.s32.to.zero.pseudo %v1844
    %v2041 = vcvt.f32.s32.to.zero.pseudo %v1845
    %v2042 = vcvt.f32.s32.to.zero.pseudo %v1846
    %v2043 = vcvt.f32.s32.to.zero.pseudo %v1847
    %v2044 = vcvt.f32.s32.to.zero.pseudo %v1848
    %v2045 = vcvt.f32.s32.to.zero.pseudo %v1849
    %v2046 = vcvt.f32.s32.to.zero.pseudo %v1850
    %v2047 = vcvt.f32.s32.to.zero.pseudo %v1851
    %v2048 = vcvt.f32.s32.to.zero.pseudo %v1852
    %v2049 = vcvt.f32.s32.to.zero.pseudo %v1853
    %v2050 = vcvt.f32.s32.to.zero.pseudo %v1854
    %v2051 = vcvt.f32.s32.to.zero.pseudo %v1855
    %v2052 = vcvt.f32.s32.to.zero.pseudo %v1856
    %v2053 = vcvt.f32.s32.to.zero.pseudo %v1857
    %v2054 = vcvt.f32.s32.to.zero.pseudo %v1858
    %v2055 = vcvt.f32.s32.to.zero.pseudo %v1859
    %v2056 = vcvt.f32.s32.to.zero.pseudo %v1860
    %v2057 = vcvt.f32.s32.to.zero.pseudo %v1861
    %v2058 = vcvt.f32.s32.to.zero.pseudo %v1862
    %v2059 = vcvt.f32.s32.to.zero.pseudo %v1863
    %v2060 = vcvt.f32.s32.to.zero.pseudo %v1864
    %v2061 = vcvt.f32.s32.to.zero.pseudo %v1865
    %v2062 = vcvt.f32.s32.to.zero.pseudo %v1866
    %v2063 = vcvt.f32.s32.to.zero.pseudo %v1867
    %v2064 = vcvt.f32.s32.to.zero.pseudo %v1868
    %v2065 = vcvt.f32.s32.to.zero.pseudo %v1869
    %v2066 = vcvt.f32.s32.to.zero.pseudo %v1870
    %v2067 = vcvt.f32.s32.to.zero.pseudo %v1871
    %v2068 = vcvt.f32.s32.to.zero.pseudo %v1872
    %v2069 = vcvt.f32.s32.to.zero.pseudo %v1873
    %v2070 = vcvt.f32.s32.to.zero.pseudo %v1874
    %v2071 = vcvt.f32.s32.to.zero.pseudo %v1875
    %v2072 = vcvt.f32.s32.to.zero.pseudo %v1876
    %v2073 = vcvt.f32.s32.to.zero.pseudo %v1877
    %v2074 = vcvt.f32.s32.to.zero.pseudo %v1878
    %v2075 = vcvt.f32.s32.to.zero.pseudo %v1879
    %v2076 = vcvt.f32.s32.to.zero.pseudo %v1880
    %v2077 = vcvt.f32.s32.to.zero.pseudo %v1881
    %v2078 = vcvt.f32.s32.to.zero.pseudo %v1882
    %v2079 = vcvt.f32.s32.to.zero.pseudo %v1883
    %v2080 = vcvt.f32.s32.to.zero.pseudo %v1884
    %v2081 = vcvt.f32.s32.to.zero.pseudo %v1885
    %v2082 = vcvt.f32.s32.to.zero.pseudo %v1886
    %v2083 = vcvt.f32.s32.to.zero.pseudo %v1887
    %v2084 = vcvt.f32.s32.to.zero.pseudo %v1888
    %v2085 = vcvt.f32.s32.to.zero.pseudo %v1889
    %v2086 = vcvt.f32.s32.to.zero.pseudo %v1890
    %v2087 = vcvt.f32.s32.to.zero.pseudo %v1891
    %v2088 = vcvt.f32.s32.to.zero.pseudo %v1892
    %v2089 = vcvt.f32.s32.to.zero.pseudo %v1893
    %v2090 = vcvt.f32.s32.to.zero.pseudo %v1894
    %v2091 = vcvt.f32.s32.to.zero.pseudo %v1895
    %v2092 = vcvt.f32.s32.to.zero.pseudo %v1896
    %v2093 = vcvt.f32.s32.to.zero.pseudo %v1897
    %v2094 = vcvt.f32.s32.to.zero.pseudo %v1898
    %v2095 = vcvt.f32.s32.to.zero.pseudo %v1899
    %v2096 = vcvt.f32.s32.to.zero.pseudo %v1900
    %v2097 = vcvt.f32.s32.to.zero.pseudo %v1901
    %v2098 = vcvt.f32.s32.to.zero.pseudo %v1902
    %v2099 = vcvt.f32.s32.to.zero.pseudo %v1903
    %v2100 = vcvt.f32.s32.to.zero.pseudo %v1904
    %v2101 = vcvt.f32.s32.to.zero.pseudo %v1905
    %v2102 = vcvt.f32.s32.to.zero.pseudo %v1906
    %v2103 = vcvt.f32.s32.to.zero.pseudo %v1907
    %v2104 = vcvt.f32.s32.to.zero.pseudo %v1908
    %v2105 = vcvt.f32.s32.to.zero.pseudo %v1909
    %v2106 = vcvt.f32.s32.to.zero.pseudo %v1910
    %v2107 = vcvt.f32.s32.to.zero.pseudo %v1911
    %v2108 = vcvt.f32.s32.to.zero.pseudo %v1912
    %v2109 = vcvt.f32.s32.to.zero.pseudo %v1913
    %v2110 = vcvt.f32.s32.to.zero.pseudo %v1914
    %v2111 = vcvt.f32.s32.to.zero.pseudo %v1915
    %v2112 = vcvt.f32.s32.to.zero.pseudo %v1916
    %v2113 = vcvt.f32.s32.to.zero.pseudo %v1917
    %v2114 = vcvt.f32.s32.to.zero.pseudo %v1918
    %v2115 = vcvt.f32.s32.to.zero.pseudo %v1919
    %v2116 = vcvt.f32.s32.to.zero.pseudo %v1920
    %v2117 = vcvt.f32.s32.to.zero.pseudo %v1921
    %v2118 = vcvt.f32.s32.to.zero.pseudo %v1922
    %v2119 = vcvt.f32.s32.to.zero.pseudo %v1923
    %v2120 = vcvt.f32.s32.to.zero.pseudo %v1924
    %v2121 = vcvt.f32.s32.to.zero.pseudo %v1925
    %v2122 = vcvt.f32.s32.to.zero.pseudo %v1926
    %v2123 = vcvt.f32.s32.to.zero.pseudo %v1927
    %v2124 = vcvt.f32.s32.to.zero.pseudo %v1928
    %v2125 = vcvt.f32.s32.to.zero.pseudo %v1929
    %v2126 = vcvt.f32.s32.to.zero.pseudo %v1930
    %v2127 = vcvt.f32.s32.to.zero.pseudo %v1931
    %v2128 = vcvt.f32.s32.to.zero.pseudo %v1932
    %v2129 = vcvt.f32.s32.to.zero.pseudo %v1933
    %v2130 = vcvt.f32.s32.to.zero.pseudo %v1934
    %v2131 = vcvt.f32.s32.to.zero.pseudo %v1935
    %v2132 = vcvt.f32.s32.to.zero.pseudo %v1936
    %v2133 = vcvt.f32.s32.to.zero.pseudo %v1937
    %v2134 = vcvt.f32.s32.to.zero.pseudo %v1938
    %v2135 = vcvt.f32.s32.to.zero.pseudo %v1939
    %v2136 = vcvt.f32.s32.to.zero.pseudo %v1940
    %v2137 = vcvt.f32.s32.to.zero.pseudo %v1941
    %v2138 = vcvt.f32.s32.to.zero.pseudo %v1942
    %v2139 = vcvt.f32.s32.to.zero.pseudo %v1943
    %v2140 = vcvt.f32.s32.to.zero.pseudo %v1944
    %v2141 = vcvt.f32.s32.to.zero.pseudo %v1945
    %v2142 = vcvt.f32.s32.to.zero.pseudo %v1946
    %v2143 = vcvt.f32.s32.to.zero.pseudo %v1947
    %v2144 = vcvt.f32.s32.to.zero.pseudo %v1948
    %v2145 = vcvt.f32.s32.to.zero.pseudo %v1949
    %v2146 = vcvt.f32.s32.to.zero.pseudo %v1950
    %v2147 = vcvt.f32.s32.to.zero.pseudo %v1951
    %v2148 = vcvt.f32.s32.to.zero.pseudo %v1952
    %v2149 = vcvt.f32.s32.to.zero.pseudo %v1953
    %v2150 = vcvt.f32.s32.to.zero.pseudo %v1954
    %v2151 = vcvt.f32.s32.to.zero.pseudo %v1955
    %v2152 = vcvt.f32.s32.to.zero.pseudo %v1956
    %v2153 = vcvt.f32.s32.to.zero.pseudo %v1957
    %v2154 = vcvt.f32.s32.to.zero.pseudo %v1958
    %v2155 = vcvt.f32.s32.to.zero.pseudo %v1959
    %v2156 = vcvt.f32.s32.to.zero.pseudo %v1960
    %v2157 = vcvt.f32.s32.to.zero.pseudo %v1961
    %v2158 = vcvt.f32.s32.to.zero.pseudo %v1962
    %v2159 = vcvt.f32.s32.to.zero.pseudo %v1963
    %v2160 = vcvt.f32.s32.to.zero.pseudo %v1964
    %v2161 = vcvt.f32.s32.to.zero.pseudo %v1965
    %v2162 = vcvt.f32.s32.to.zero.pseudo %v1966
    %v2163 = vcvt.f32.s32.to.zero.pseudo %v1967
    %v2164 = vcvt.f32.s32.to.zero.pseudo %v1968
    %v2165 = vcvt.f32.s32.to.zero.pseudo %v1969
    %v2166 = vcvt.f32.s32.to.zero.pseudo %v1970
    %v2167 = vcvt.f32.s32.to.zero.pseudo %v1971
    %v2168 = vcvt.f32.s32.to.zero.pseudo %v1972
    %v2169 = vcvt.f32.s32.to.zero.pseudo %v1973
    %v2170 = vcvt.f32.s32.to.zero.pseudo %v1974
    %v2171 = vcvt.f32.s32.to.zero.pseudo %v1975
    %v2172 = vcvt.f32.s32.to.zero.pseudo %v1976
    %v2173 = vcvt.f32.s32.to.zero.pseudo %v1977
    %v2174 = vcvt.f32.s32.to.zero.pseudo %v1978
    %v2175 = vcvt.f32.s32.to.zero.pseudo %v1979
    %v2176 = vcvt.f32.s32.to.zero.pseudo %v1980
    %v2177 = vcvt.f32.s32.to.zero.pseudo %v1981
    %v2178 = vcvt.f32.s32.to.zero.pseudo %v1982
    %v2179 = vcvt.f32.s32.to.zero.pseudo %v1983
    %v2180 = vcvt.f32.s32.to.zero.pseudo %v1984
    %v2181 = vcvt.f32.s32.to.zero.pseudo %v1985
    %v2182 = vcvt.f32.s32.to.zero.pseudo %v1986
    %v2183 = vcvt.f32.s32.to.zero.pseudo %v1987
    %v2184 = vcvt.f32.s32.to.zero.pseudo %v1988
    %v2185 = vcvt.f32.s32.to.zero.pseudo %v1989
    %v2186 = vcvt.f32.s32.to.zero.pseudo %v1990
    %v2187 = vcvt.f32.s32.to.zero.pseudo %v1991
    %v2188 = vcvt.f32.s32.to.zero.pseudo %v1992
    %v2189 = vcvt.f32.s32.to.zero.pseudo %v1993
    %v2190 = vcvt.f32.s32.to.zero.pseudo %v1994
    %v2191 = vcvt.f32.s32.to.zero.pseudo %v1995
    %v2192 = vcvt.f32.s32.to.zero.pseudo %v1996
    %v2193 = vcvt.f32.s32.to.zero.pseudo %v1997
    %v2194 = vcvt.f32.s32.to.zero.pseudo %v1998
    %v2195 = vcvt.f32.s32.to.zero.pseudo %v1999
    %v2196 = vcvt.f32.s32.to.zero.pseudo %v2000
    %v2197 = vcvt.f32.s32.to.zero.pseudo %v2001
    %v2198 = vcvt.f32.s32.to.zero.pseudo %v2002
    %v2199 = vpack.c.b16 %v2010, %v2003
    %v2200 = vpack.c.b16 %v2024, %v2017
    %v2201 = vpack.c.b8 %v2200, %v2199
    %v2202 = vpack.c.b16 %v2011, %v2004
    %v2203 = vpack.c.b16 %v2025, %v2018
    %v2204 = vpack.c.b8 %v2203, %v2202
    %v2205 = vpack.c.b16 %v2012, %v2005
    %v2206 = vpack.c.b16 %v2026, %v2019
    %v2207 = vpack.c.b8 %v2206, %v2205
    %v2208 = vpack.c.b16 %v2013, %v2006
    %v2209 = vpack.c.b16 %v2027, %v2020
    %v2210 = vpack.c.b8 %v2209, %v2208
    %v2211 = vpack.c.b16 %v2014, %v2007
    %v2212 = vpack.c.b16 %v2028, %v2021
    %v2213 = vpack.c.b8 %v2212, %v2211
    %v2214 = vpack.c.b16 %v2015, %v2008
    %v2215 = vpack.c.b16 %v2029, %v2022
    %v2216 = vpack.c.b8 %v2215, %v2214
    %v2217 = vpack.c.b16 %v2016, %v2009
    %v2218 = vpack.c.b16 %v2030, %v2023
    %v2219 = vpack.c.b8 %v2218, %v2217
    %v2220 = vpack.c.b16 %v2038, %v2031
    %v2221 = vpack.c.b16 %v2052, %v2045
    %v2222 = vpack.c.b8 %v2221, %v2220
    %v2223 = vpack.c.b16 %v2039, %v2032
    %v2224 = vpack.c.b16 %v2053, %v2046
    %v2225 = vpack.c.b8 %v2224, %v2223
    %v2226 = vpack.c.b16 %v2040, %v2033
    %v2227 = vpack.c.b16 %v2054, %v2047
    %v2228 = vpack.c.b8 %v2227, %v2226
    %v2229 = vpack.c.b16 %v2041, %v2034
    %v2230 = vpack.c.b16 %v2055, %v2048
    %v2231 = vpack.c.b8 %v2230, %v2229
    %v2232 = vpack.c.b16 %v2042, %v2035
    %v2233 = vpack.c.b16 %v2056, %v2049
    %v2234 = vpack.c.b8 %v2233, %v2232
    %v2235 = vpack.c.b16 %v2043, %v2036
    %v2236 = vpack.c.b16 %v2057, %v2050
    %v2237 = vpack.c.b8 %v2236, %v2235
    %v2238 = vpack.c.b16 %v2044, %v2037
    %v2239 = vpack.c.b16 %v2058, %v2051
    %v2240 = vpack.c.b8 %v2239, %v2238
    %v2241 = vpack.c.b16 %v2066, %v2059
    %v2242 = vpack.c.b16 %v2080, %v2073
    %v2243 = vpack.c.b8 %v2242, %v2241
    %v2244 = vpack.c.b16 %v2067, %v2060
    %v2245 = vpack.c.b16 %v2081, %v2074
    %v2246 = vpack.c.b8 %v2245, %v2244
    %v2247 = vpack.c.b16 %v2068, %v2061
    %v2248 = vpack.c.b16 %v2082, %v2075
    %v2249 = vpack.c.b8 %v2248, %v2247
    %v2250 = vpack.c.b16 %v2069, %v2062
    %v2251 = vpack.c.b16 %v2083, %v2076
    %v2252 = vpack.c.b8 %v2251, %v2250
    %v2253 = vpack.c.b16 %v2070, %v2063
    %v2254 = vpack.c.b16 %v2084, %v2077
    %v2255 = vpack.c.b8 %v2254, %v2253
    %v2256 = vpack.c.b16 %v2071, %v2064
    %v2257 = vpack.c.b16 %v2085, %v2078
    %v2258 = vpack.c.b8 %v2257, %v2256
    %v2259 = vpack.c.b16 %v2072, %v2065
    %v2260 = vpack.c.b16 %v2086, %v2079
    %v2261 = vpack.c.b8 %v2260, %v2259
    %v2262 = vpack.c.b16 %v2094, %v2087
    %v2263 = vpack.c.b16 %v2108, %v2101
    %v2264 = vpack.c.b8 %v2263, %v2262
    %v2265 = vpack.c.b16 %v2095, %v2088
    %v2266 = vpack.c.b16 %v2109, %v2102
    %v2267 = vpack.c.b8 %v2266, %v2265
    %v2268 = vpack.c.b16 %v2096, %v2089
    %v2269 = vpack.c.b16 %v2110, %v2103
    %v2270 = vpack.c.b8 %v2269, %v2268
    %v2271 = vpack.c.b16 %v2097, %v2090
    %v2272 = vpack.c.b16 %v2111, %v2104
    %v2273 = vpack.c.b8 %v2272, %v2271
    %v2274 = vpack.c.b16 %v2098, %v2091
    %v2275 = vpack.c.b16 %v2112, %v2105
    %v2276 = vpack.c.b8 %v2275, %v2274
    %v2277 = vpack.c.b16 %v2099, %v2092
    %v2278 = vpack.c.b16 %v2113, %v2106
    %v2279 = vpack.c.b8 %v2278, %v2277
    %v2280 = vpack.c.b16 %v2100, %v2093
    %v2281 = vpack.c.b16 %v2114, %v2107
    %v2282 = vpack.c.b8 %v2281, %v2280
    %v2283 = vpack.c.b16 %v2122, %v2115
    %v2284 = vpack.c.b16 %v2136, %v2129
    %v2285 = vpack.c.b8 %v2284, %v2283
    %v2286 = vpack.c.b16 %v2123, %v2116
    %v2287 = vpack.c.b16 %v2137, %v2130
    %v2288 = vpack.c.b8 %v2287, %v2286
    %v2289 = vpack.c.b16 %v2124, %v2117
    %v2290 = vpack.c.b16 %v2138, %v2131
    %v2291 = vpack.c.b8 %v2290, %v2289
    %v2292 = vpack.c.b16 %v2125, %v2118
    %v2293 = vpack.c.b16 %v2139, %v2132
    %v2294 = vpack.c.b8 %v2293, %v2292
    %v2295 = vpack.c.b16 %v2126, %v2119
    %v2296 = vpack.c.b16 %v2140, %v2133
    %v2297 = vpack.c.b8 %v2296, %v2295
    %v2298 = vpack.c.b16 %v2127, %v2120
    %v2299 = vpack.c.b16 %v2141, %v2134
    %v2300 = vpack.c.b8 %v2299, %v2298
    %v2301 = vpack.c.b16 %v2128, %v2121
    %v2302 = vpack.c.b16 %v2142, %v2135
    %v2303 = vpack.c.b8 %v2302, %v2301
    %v2304 = vpack.c.b16 %v2150, %v2143
    %v2305 = vpack.c.b16 %v2164, %v2157
    %v2306 = vpack.c.b8 %v2305, %v2304
    %v2307 = vpack.c.b16 %v2151, %v2144
    %v2308 = vpack.c.b16 %v2165, %v2158
    %v2309 = vpack.c.b8 %v2308, %v2307
    %v2310 = vpack.c.b16 %v2152, %v2145
    %v2311 = vpack.c.b16 %v2166, %v2159
    %v2312 = vpack.c.b8 %v2311, %v2310
    %v2313 = vpack.c.b16 %v2153, %v2146
    %v2314 = vpack.c.b16 %v2167, %v2160
    %v2315 = vpack.c.b8 %v2314, %v2313
    %v2316 = vpack.c.b16 %v2154, %v2147
    %v2317 = vpack.c.b16 %v2168, %v2161
    %v2318 = vpack.c.b8 %v2317, %v2316
    %v2319 = vpack.c.b16 %v2155, %v2148
    %v2320 = vpack.c.b16 %v2169, %v2162
    %v2321 = vpack.c.b8 %v2320, %v2319
    %v2322 = vpack.c.b16 %v2156, %v2149
    %v2323 = vpack.c.b16 %v2170, %v2163
    %v2324 = vpack.c.b8 %v2323, %v2322
    %v2325 = vpack.c.b16 %v2178, %v2171
    %v2326 = vpack.c.b16 %v2192, %v2185
    %v2327 = vpack.c.b8 %v2326, %v2325
    %v2328 = vpack.c.b16 %v2179, %v2172
    %v2329 = vpack.c.b16 %v2193, %v2186
    %v2330 = vpack.c.b8 %v2329, %v2328
    %v2331 = vpack.c.b16 %v2180, %v2173
    %v2332 = vpack.c.b16 %v2194, %v2187
    %v2333 = vpack.c.b8 %v2332, %v2331
    %v2334 = vpack.c.b16 %v2181, %v2174
    %v2335 = vpack.c.b16 %v2195, %v2188
    %v2336 = vpack.c.b8 %v2335, %v2334
    %v2337 = vpack.c.b16 %v2182, %v2175
    %v2338 = vpack.c.b16 %v2196, %v2189
    %v2339 = vpack.c.b8 %v2338, %v2337
    %v2340 = vpack.c.b16 %v2183, %v2176
    %v2341 = vpack.c.b16 %v2197, %v2190
    %v2342 = vpack.c.b8 %v2341, %v2340
    %v2343 = vpack.c.b16 %v2184, %v2177
    %v2344 = vpack.c.b16 %v2198, %v2191
    %v2345 = vpack.c.b8 %v2344, %v2343
    %2346 = vst [vmem:[#allocation5] sm:$0xff] %v2201
    %2347 = vst [vmem:[#allocation5 + $0x8] sm:$0xff] %v2204
    %2348 = vst [vmem:[#allocation5 + $0x10] sm:$0xff] %v2207
    %2349 = vst [vmem:[#allocation5 + $0x18] sm:$0xff] %v2210
    %2350 = vst [vmem:[#allocation5 + $0x20] sm:$0xff] %v2213
    %2351 = vst [vmem:[#allocation5 + $0x28] sm:$0xff] %v2216
    %2352 = vst [vmem:[#allocation5 + $0x30] sm:$0xff] %v2219
    %2353 = vst [vmem:[#allocation5 + $0x38] sm:$0xff] %v2222
    %2354 = vst [vmem:[#allocation5 + $0x40] sm:$0xff] %v2225
    %2355 = vst [vmem:[#allocation5 + $0x48] sm:$0xff] %v2228
    %2356 = vst [vmem:[#allocation5 + $0x50] sm:$0xff] %v2231
    %2357 = vst [vmem:[#allocation5 + $0x58] sm:$0xff] %v2234
    %2358 = vst [vmem:[#allocation5 + $0x60] sm:$0xff] %v2237
    %2359 = vst [vmem:[#allocation5 + $0x68] sm:$0xff] %v2240
    %2360 = vst [vmem:[#allocation5 + $0x70] sm:$0xff] %v2243
    %2361 = vst [vmem:[#allocation5 + $0x78] sm:$0xff] %v2246
    %2362 = vst [vmem:[#allocation5 + $0x80] sm:$0xff] %v2249
    %2363 = vst [vmem:[#allocation5 + $0x88] sm:$0xff] %v2252
    %2364 = vst [vmem:[#allocation5 + $0x90] sm:$0xff] %v2255
    %2365 = vst [vmem:[#allocation5 + $0x98] sm:$0xff] %v2258
    %2366 = vst [vmem:[#allocation5 + $0xa0] sm:$0xff] %v2261
    %2367 = vst [vmem:[#allocation5 + $0xa8] sm:$0xff] %v2264
    %2368 = vst [vmem:[#allocation5 + $0xb0] sm:$0xff] %v2267
    %2369 = vst [vmem:[#allocation5 + $0xb8] sm:$0xff] %v2270
    %2370 = vst [vmem:[#allocation5 + $0xc0] sm:$0xff] %v2273
    %2371 = vst [vmem:[#allocation5 + $0xc8] sm:$0xff] %v2276
    %2372 = vst [vmem:[#allocation5 + $0xd0] sm:$0xff] %v2279
    %2373 = vst [vmem:[#allocation5 + $0xd8] sm:$0xff] %v2282
    %2374 = vst [vmem:[#allocation5 + $0xe0] sm:$0xff] %v2285
    %2375 = vst [vmem:[#allocation5 + $0xe8] sm:$0xff] %v2288
    %2376 = vst [vmem:[#allocation5 + $0xf0] sm:$0xff] %v2291
    %2377 = vst [vmem:[#allocation5 + $0xf8] sm:$0xff] %v2294
    %2378 = vst [vmem:[#allocation5 + $0x100] sm:$0xff] %v2297
    %2379 = vst [vmem:[#allocation5 + $0x108] sm:$0xff] %v2300
    %2380 = vst [vmem:[#allocation5 + $0x110] sm:$0xff] %v2303
    %2381 = vst [vmem:[#allocation5 + $0x118] sm:$0xff] %v2306
    %2382 = vst [vmem:[#allocation5 + $0x120] sm:$0xff] %v2309
    %2383 = vst [vmem:[#allocation5 + $0x128] sm:$0xff] %v2312
    %2384 = vst [vmem:[#allocation5 + $0x130] sm:$0xff] %v2315
    %2385 = vst [vmem:[#allocation5 + $0x138] sm:$0xff] %v2318
    %2386 = vst [vmem:[#allocation5 + $0x140] sm:$0xff] %v2321
    %2387 = vst [vmem:[#allocation5 + $0x148] sm:$0xff] %v2324
    %2388 = vst [vmem:[#allocation5 + $0x150] sm:$0xff] %v2327
    %2389 = vst [vmem:[#allocation5 + $0x158] sm:$0xff] %v2330
    %2390 = vst [vmem:[#allocation5 + $0x160] sm:$0xff] %v2333
    %2391 = vst [vmem:[#allocation5 + $0x168] sm:$0xff] %v2336
    %2392 = vst [vmem:[#allocation5 + $0x170] sm:$0xff] %v2339
    %2393 = vst [vmem:[#allocation5 + $0x178] sm:$0xff] %v2342
    %2394 = vst [vmem:[#allocation5 + $0x180] sm:$0xff] %v2345
    // Predicated region
    $region18: #{tpu_custom_call.1} parent=1 // pred_check
      _
    $region19: #{tpu_custom_call.1} parent=1 // pred_check_branch
      %2396 = sbr.rel (0) target = $region21
    $region20: #{tpu_custom_call.1} parent=1 // pred_region
      %s2398 = ssub.s32 6272, 6272
      %2399 = vsyncadd [#allocation4], %s2398
      %s2400 = sshll.u32 [#allocation5], 4
      %s2401 = int_to_ptr.vmem [resolvable:$true] %s2400
      %2406 = dma.vmem_to_hbm [thread:$0]  %s2401, 6272, %s3, [#allocation4], 896, 896, 56
    $region21: #{tpu_custom_call.1} parent=1 // pred_fallthru
      _
    // Predicated region
    $region22: #{tpu_custom_call.1} parent=1 // pred_check
      _
    $region23: #{tpu_custom_call.1} parent=1 // pred_check_branch
      %2408 = sbr.rel (0) target = $region25
    $region24: #{tpu_custom_call.1} parent=1 // pred_region
      %2409 = dma.done [#allocation4], 6272
    $region25: #{tpu_custom_call.1} parent=1 // pred_fallthru
      _
    %2410 = vsyncpa [#allocation3], 1
    %2411 = vsyncpa [#allocation4], 1

</llo_original>
